<compile_context>
chip_gen: v7x
topology: tpu7x:2x2x1
jax: 0.10.0
libtpu: 0.0.40
codegen_flags: <defaults>
</compile_context>

<pallas_src>
import functools

import jax
import jax.numpy as jnp
from jax.experimental import pallas as pl
from jax.experimental.pallas import tpu as pltpu


# --------------------------------------------------------------------------- helpers

def _tree_reduce(fn, xs):
    """Balanced pairwise reduction (shorter dependency chain than a linear fold)."""
    xs = list(xs)
    while len(xs) > 1:
        nxt = [fn(xs[i], xs[i + 1]) for i in range(0, len(xs) - 1, 2)]
        if len(xs) % 2:
            nxt.append(xs[-1])
        xs = nxt
    return xs[0]


def _sep_window(pad_ref, col_ref, red, k, n_rows, W):
    """k x k separable window reduction over a neutral-padded VMEM scratch.

    pad_ref: (n_rows + k - 1, W + k - 1) scratch already holding data + neutral fill.
    col_ref: (n_rows, W + k - 1) scratch for the row-pass result.
    Returns an (n_rows, W) value.  All window offsets are static Ref slices.
    """
    rows = [pad_ref[dy:dy + n_rows, :] for dy in range(k)]
    col_ref[...] = _tree_reduce(red, rows)
    cols = [col_ref[:, dx:dx + W] for dx in range(k)]
    return _tree_reduce(red, cols)


# --------------------------------------------------------------------------- kernels

def _blur_kernel(nr_main, nr_top, nr_bot, rf_main, rf_top, rf_bot,
                 nr_out, rf_out, pad_scr, col_scr, *, T, W, k):
    """5x5 zero-padded box blur of both images for one (plane, row-tile) block."""
    r = k // 2
    inv = 1.0 / float(k * k)

    def blur_one(main_ref, top_ref, bot_ref, out_ref):
        pad_scr[...] = jnp.zeros(pad_scr.shape, pad_scr.dtype)       # zero fill = avg_pool pad
        pad_scr[0:r, r:r + W] = top_ref[0, 0]
        pad_scr[r:r + T, r:r + W] = main_ref[0]
        pad_scr[r + T:2 * r + T, r:r + W] = bot_ref[0, 0]
        s = _sep_window(pad_scr, col_scr, jnp.add, k, T, W)
        out_ref[0] = (s * inv).astype(out_ref.dtype)

    blur_one(nr_main, nr_top, nr_bot, nr_out)
    blur_one(rf_main, rf_top, rf_bot, rf_out)


def _mask_kernel(scal_ref, nr_ref, rf_ref, mask_ref, *, threshold):
    """match_brightness rescale + |diff| > thr + any-over-channel -> (T, W) mask."""
    factor = scal_ref[0]
    m_min = scal_ref[1]
    scale = scal_ref[2]     # (nr_max - nr_min) / (m_max - m_min)
    nr_min = scal_ref[3]
    nr = nr_ref[0]          # (C, T, W)
    rf = rf_ref[0]
    m = jnp.clip(nr * factor, 0.0, 1.0)
    m = (m - m_min) * scale + nr_min
    hit = (jnp.abs(m - rf) > threshold).astype(jnp.float32)
    mask_ref[0] = jnp.max(hit, axis=0)          # any-over-channel on {0,1}


def _erode_dilate_kernel(main_ref, top_ref, bot_ref, ghost_ref, nghost_ref,
                         m_scr, ecol_scr, e_scr, dcol_scr, *, T, W, H, ke, kd):
    """Fused rect erode -> rect dilate -> (ghost, 1 - ghost) on a single-channel mask."""
    re, rd = ke // 2, kd // 2
    hm = re + rd                  # mask halo rows per side
    E = T + 2 * rd                # eroded rows needed by the dilation

    # mask window with erode-neutral (1.0) fill: out-of-image pixels never win the min
    m_scr[...] = jnp.ones(m_scr.shape, m_scr.dtype)
    m_scr[0:hm, re:re + W] = top_ref[0, 0]
    m_scr[hm:hm + T, re:re + W] = main_ref[0]
    m_scr[hm + T:hm + T + hm, re:re + W] = bot_ref[0, 0]

    eroded = _sep_window(m_scr, ecol_scr, jnp.minimum, ke, E, W)       # (E, W)

    # eroded rows lying outside the image must not feed the dilation (cv2 border ignored)
    g0 = pl.program_id(1) * T
    row = jax.lax.broadcasted_iota(jnp.int32, (E, W), 0) + (g0 - rd)
    eroded = jnp.where(jnp.logical_and(row >= 0, row < H), eroded, 0.0)

    # eroded window with dilate-neutral (0.0) fill
    e_scr[...] = jnp.zeros(e_scr.shape, e_scr.dtype)
    e_scr[:, rd:rd + W] = eroded
    ghost = _sep_window(e_scr, dcol_scr, jnp.maximum, kd, T, W)        # (T, W)

    ghost_ref[0] = ghost.astype(ghost_ref.dtype)
    nghost_ref[0] = (1.0 - ghost).astype(nghost_ref.dtype)


# --------------------------------------------------------------------------- wrapper

def _pick_tile(H, min_tile, max_tile=128):
    """Largest row tile <= max_tile that divides H, is a multiple of 8 and >= min_tile
    (so halos fit inside one neighbouring tile).  Falls back to the whole height
    (block dim == full dim is always legal)."""
    if H <= max_tile:
        return H
    t = max_tile - (max_tile % 8)
    while t >= max(8, min_tile):
        if H % t == 0:
            return t
        t -= 8
    return H


def _row_halos(x, tile, halo, fill):
    """x: (..., H, W) -> (top, bot) of shape (..., n_t, halo, W).

    top[..., t] / bot[..., t] are the `halo` rows directly above / below row-tile t,
    with `fill` (the neutral element of the following window op) for rows outside
    the image.  Cost ~ 2*halo/tile of one tensor pass - no full padded copies."""
    *lead, H, W = x.shape
    n_t = H // tile
    xr = x.reshape(*lead, n_t, tile, W)
    fill_blk = jnp.full(tuple(lead) + (1, halo, W), fill, x.dtype)
    if n_t == 1:
        return fill_blk, fill_blk
    top = jnp.concatenate([fill_blk, xr[..., :-1, tile - halo:, :]], axis=-3)
    bot = jnp.concatenate([xr[..., 1:, :halo, :], fill_blk], axis=-3)
    return top, bot


_CP = pltpu.CompilerParams(dimension_semantics=("parallel", "parallel"),
                           vmem_limit_bytes=48 * 1024 * 1024)


def get_mask(non_refer, refer, *, threshold=0.3, erode_kernel_size=11,
             dilate_kernel_size=11, iterations=1):
    """Pallas TPU implementation of GetMask.forward (NCHW float inputs/outputs)."""
    assert iterations >= 1
    assert erode_kernel_size >= 3 and erode_kernel_size % 2 == 1
    assert dilate_kernel_size >= 3 and dilate_kernel_size % 2 == 1
    # TODO(synk): even / size-1 structuring elements (asymmetric cv2 anchor) not supported.

    # n iterated rect erosions/dilations with cv2's ignore-border == one pass with the
    # Minkowski-summed rect of size (k-1)*n + 1 (exact on a box domain).
    ke = (erode_kernel_size - 1) * iterations + 1
    kd = (dilate_kernel_size - 1) * iterations + 1

    B, C, H, W = non_refer.shape
    f32 = jnp.float32
    nr = non_refer.astype(f32)
    rf = refer.astype(f32)

    re, rd = ke // 2, kd // 2
    morph_halo = re + rd
    T = _pick_tile(H, min_tile=max(morph_halo, 8))
    n_t = H // T
    P = B * C

    # ---- stage 1: 5x5 average blur of both images (one fused, tiled pallas_call) ----
    kb, rb = 5, 2
    nr3 = nr.reshape(P, H, W)
    rf3 = rf.reshape(P, H, W)
    nr_top, nr_bot = _row_halos(nr3, T, rb, 0.0)
    rf_top, rf_bot = _row_halos(rf3, T, rb, 0.0)

    plane_spec = pl.BlockSpec((1, T, W), lambda p, t: (p, t, 0))
    halo_spec_b = pl.BlockSpec((1, 1, rb, W), lambda p, t: (p, t, 0, 0))
    plane = jax.ShapeDtypeStruct((P, H, W), f32)

    nr_b, rf_b = pl.pallas_call(
        functools.partial(_blur_kernel, T=T, W=W, k=kb),
        grid=(P, n_t),
        in_specs=[plane_spec, halo_spec_b, halo_spec_b,
                  plane_spec, halo_spec_b, halo_spec_b],
        out_specs=(plane_spec, plane_spec),
        out_shape=(plane, plane),
        scratch_shapes=[pltpu.VMEM((T + 2 * rb, W + 2 * rb), f32),
                        pltpu.VMEM((T, W + 2 * rb), f32)],
        compiler_params=_CP,
    )(nr3, nr_top, nr_bot, rf3, rf_top, rf_bot)

    # ---- stage 2a: match_brightness global scalars (XLA fused reductions -> SMEM) ----
    factor = jnp.mean(rf_b) / jnp.mean(nr_b)
    m = jnp.clip(nr_b * factor, 0.0, 1.0)
    m_min = jnp.min(m)
    nr_min = jnp.min(nr_b)
    scale = (jnp.max(nr_b) - nr_min) / (jnp.max(m) - m_min)
    scal = jnp.stack([factor, m_min, scale, nr_min]).astype(f32)

    # ---- stage 2b: rescale + threshold + any-over-channel -> single-channel mask ----
    nr4 = nr_b.reshape(B, C, H, W)
    rf4 = rf_b.reshape(B, C, H, W)
    bchw_spec = pl.BlockSpec((1, C, T, W), lambda b, t: (b, 0, t, 0))
    bhw_spec = pl.BlockSpec((1, T, W), lambda b, t: (b, t, 0))
    mask = pl.pallas_call(
        functools.partial(_mask_kernel, threshold=float(threshold)),
        grid=(B, n_t),
        in_specs=[pl.BlockSpec(memory_space=pltpu.MemorySpace.SMEM),
                  bchw_spec, bchw_spec],
        out_specs=bhw_spec,
        out_shape=jax.ShapeDtypeStruct((B, H, W), f32),
        compiler_params=_CP,
    )(scal, nr4, rf4)

    # ---- stage 3: fused erode -> dilate -> (ghost, 1 - ghost), single channel ----
    mk_top, mk_bot = _row_halos(mask, T, morph_halo, 1.0)
    halo_spec_m = pl.BlockSpec((1, 1, morph_halo, W), lambda b, t: (b, t, 0, 0))
    ghost1, nghost1 = pl.pallas_call(
        functools.partial(_erode_dilate_kernel, T=T, W=W, H=H, ke=ke, kd=kd),
        grid=(B, n_t),
        in_specs=[bhw_spec, halo_spec_m, halo_spec_m],
        out_specs=(bhw_spec, bhw_spec),
        out_shape=(jax.ShapeDtypeStruct((B, H, W), f32),
                   jax.ShapeDtypeStruct((B, H, W), f32)),
        scratch_shapes=[pltpu.VMEM((T + 2 * morph_halo, W + 2 * re), f32),
                        pltpu.VMEM((T + 2 * rd, W + 2 * re), f32),
                        pltpu.VMEM((T + 2 * rd, W + 2 * rd), f32),
                        pltpu.VMEM((T, W + 2 * rd), f32)],
        compiler_params=_CP,
    )(mask, mk_top, mk_bot)

    # replicate the single-channel masks to C channels only at the output write
    ghost = jnp.broadcast_to(ghost1[:, None, :, :], (B, C, H, W))
    non_ghost = jnp.broadcast_to(nghost1[:, None, :, :], (B, C, H, W))
    return ghost, non_ghost


# --------------------------------------------------------------------------- pure-JAX reference

def _reference_get_mask(non_refer, refer, threshold, ek, dk, iterations):
    """Pure-JAX/XLA reference (no Pallas) used for verification."""
    nr = non_refer.astype(jnp.float32)
    rf = refer.astype(jnp.float32)
    B, C, H, W = nr.shape

    def blur(x):
        xp = jnp.pad(x, ((0, 0), (0, 0), (2, 2), (2, 2)))
        col = _tree_reduce(jnp.add, [xp[:, :, dy:dy + H, :] for dy in range(5)])
        out = _tree_reduce(jnp.add, [col[:, :, :, dx:dx + W] for dx in range(5)])
        return out * (1.0 / 25.0)

    nrb, rfb = blur(nr), blur(rf)
    factor = jnp.mean(rfb) / jnp.mean(nrb)
    m = jnp.clip(nrb * factor, 0.0, 1.0)
    m_min = jnp.min(m)
    nr_min = jnp.min(nrb)
    scale = (jnp.max(nrb) - nr_min) / (jnp.max(m) - m_min)
    m = (m - m_min) * scale + nr_min
    mask = jnp.any(jnp.abs(m - rfb) > threshold, axis=1, keepdims=True)
    mask = jnp.broadcast_to(mask, (B, C, H, W)).astype(jnp.float32)

    def win(x, k, op):
        p = k // 2
        fill = 1.0 if op == "min" else 0.0    # == cv2 ignore-border on {0,1} masks
        red = jnp.minimum if op == "min" else jnp.maximum
        xp = jnp.pad(x, ((0, 0), (0, 0), (p, p), (p, p)), constant_values=fill)
        col = _tree_reduce(red, [xp[:, :, dy:dy + H, :] for dy in range(k)])
        return _tree_reduce(red, [col[:, :, :, dx:dx + W] for dx in range(k)])

    x = mask
    for _ in range(iterations):
        x = win(x, ek, "min")
    for _ in range(iterations):
        x = win(x, dk, "max")
    return x, 1.0 - x


# --------------------------------------------------------------------------- demo / checks

if __name__ == "__main__":
    fn = jax.jit(functools.partial(get_mask, threshold=0.3,
                                   erode_kernel_size=11, dilate_kernel_size=11,
                                   iterations=1))

    def run_case(key, B, C, H, W):
        k1, k2 = jax.random.split(key)
        non_refer = jax.random.uniform(k1, (B, C, H, W), dtype=jnp.float32)
        refer = jax.random.uniform(k2, (B, C, H, W), dtype=jnp.float32)

        ghost, non_ghost = fn(non_refer, refer)
        jax.block_until_ready((ghost, non_ghost))

        # structural checks: binary, complementary, identical over the channel axis
        assert ghost.shape == (B, C, H, W) and non_ghost.shape == (B, C, H, W)
        assert bool(jnp.all((ghost == 0.0) | (ghost == 1.0)))
        assert bool(jnp.all(ghost + non_ghost == 1.0))
        assert bool(jnp.all(ghost == ghost[:, :1]))

        # reference check (small tolerance on the mismatch fraction absorbs rare
        # ulp-level threshold flips caused by differing XLA reduction fusion of the
        # global-mean scalar between the two compilations)
        g_ref, ng_ref = _reference_get_mask(non_refer, refer, 0.3, 11, 11, 1)
        mism = float(jnp.mean((ghost != g_ref).astype(jnp.float32)))
        assert mism < 0.02, f"ghost mismatch fraction vs reference: {mism}"
        mism2 = float(jnp.mean((non_ghost != ng_ref).astype(jnp.float32)))
        assert mism2 < 0.02, f"non_ghost mismatch fraction vs reference: {mism2}"

    key = jax.random.PRNGKey(0)
    ka, kb = jax.random.split(key)
    run_case(ka, 2, 3, 16, 16)      # single-tile path (block == full plane)
    run_case(kb, 1, 3, 256, 128)    # multi-row-tile path (T=128, n_t=2, real halos)

    print("KERNEL_OK")
</pallas_src>

<mosaic_0001>
module attributes {stable_mosaic.version = 11 : i64} {
  func.func @_blur_kernel(%arg0: i32, %arg1: i32, %arg2: memref<1x16x16xf32, #tpu.memory_space<vmem>>, %arg3: memref<1x1x2x16xf32, #tpu.memory_space<vmem>>, %arg4: memref<1x1x2x16xf32, #tpu.memory_space<vmem>>, %arg5: memref<1x16x16xf32, #tpu.memory_space<vmem>>, %arg6: memref<1x1x2x16xf32, #tpu.memory_space<vmem>>, %arg7: memref<1x1x2x16xf32, #tpu.memory_space<vmem>>, %arg8: memref<1x16x16xf32, #tpu.memory_space<vmem>>, %arg9: memref<1x16x16xf32, #tpu.memory_space<vmem>>, %arg10: memref<20x20xf32, #tpu.memory_space<vmem>>, %arg11: memref<16x20xf32, #tpu.memory_space<vmem>>) attributes {dimension_semantics = [#tpu.dimension_semantics<parallel>, #tpu.dimension_semantics<parallel>], iteration_bounds = array<i64: 6, 1>, scalar_prefetch = 0 : i64, scratch_operands = 2 : i64, tpu.core_type = #tpu.core_type<tc>, window_params = [{transform_indices = @transform_0, window_bounds = array<i64: 1, 16, 16>}, {transform_indices = @transform_1, window_bounds = array<i64: 1, 1, 2, 16>}, {transform_indices = @transform_2, window_bounds = array<i64: 1, 1, 2, 16>}, {transform_indices = @transform_3, window_bounds = array<i64: 1, 16, 16>}, {transform_indices = @transform_4, window_bounds = array<i64: 1, 1, 2, 16>}, {transform_indices = @transform_5, window_bounds = array<i64: 1, 1, 2, 16>}, {transform_indices = @transform_6, window_bounds = array<i64: 1, 16, 16>}, {transform_indices = @transform_7, window_bounds = array<i64: 1, 16, 16>}]} {
    %cst = arith.constant 0.000000e+00 : f32
    %0 = vector.broadcast %cst : f32 to vector<20x20xf32>
    %c0 = arith.constant 0 : index
    %c0_0 = arith.constant 0 : index
    %1 = vector.load %arg10[%c0, %c0_0] : memref<20x20xf32, #tpu.memory_space<vmem>>, vector<20x20xf32>
    tpu.vector_store %arg10[%c0, %c0_0], %0 {strides = array<i32>} : memref<20x20xf32, #tpu.memory_space<vmem>>, vector<20x20xf32>,
    %c0_1 = arith.constant 0 : index
    %c0_2 = arith.constant 0 : index
    %c0_3 = arith.constant 0 : index
    %c0_4 = arith.constant 0 : index
    %2 = vector.load %arg3[%c0_1, %c0_2, %c0_3, %c0_4] : memref<1x1x2x16xf32, #tpu.memory_space<vmem>>, vector<1x1x2x16xf32>
    %3 = vector.shape_cast %2 : vector<1x1x2x16xf32> to vector<2x16xf32>
    %c0_5 = arith.constant 0 : index
    %c2 = arith.constant 2 : index
    %4 = vector.load %arg10[%c0_5, %c2] : memref<20x20xf32, #tpu.memory_space<vmem>>, vector<2x16xf32>
    tpu.vector_store %arg10[%c0_5, %c2], %3 {strides = array<i32>} : memref<20x20xf32, #tpu.memory_space<vmem>>, vector<2x16xf32>,
    %c0_6 = arith.constant 0 : index
    %c0_7 = arith.constant 0 : index
    %c0_8 = arith.constant 0 : index
    %5 = vector.load %arg2[%c0_6, %c0_7, %c0_8] : memref<1x16x16xf32, #tpu.memory_space<vmem>>, vector<1x16x16xf32>
    %6 = vector.shape_cast %5 : vector<1x16x16xf32> to vector<16x16xf32>
    %c2_9 = arith.constant 2 : index
    %c2_10 = arith.constant 2 : index
    %7 = vector.load %arg10[%c2_9, %c2_10] : memref<20x20xf32, #tpu.memory_space<vmem>>, vector<16x16xf32>
    tpu.vector_store %arg10[%c2_9, %c2_10], %6 {strides = array<i32>} : memref<20x20xf32, #tpu.memory_space<vmem>>, vector<16x16xf32>,
    %c0_11 = arith.constant 0 : index
    %c0_12 = arith.constant 0 : index
    %c0_13 = arith.constant 0 : index
    %c0_14 = arith.constant 0 : index
    %8 = vector.load %arg4[%c0_11, %c0_12, %c0_13, %c0_14] : memref<1x1x2x16xf32, #tpu.memory_space<vmem>>, vector<1x1x2x16xf32>
    %9 = vector.shape_cast %8 : vector<1x1x2x16xf32> to vector<2x16xf32>
    %c18 = arith.constant 18 : index
    %c2_15 = arith.constant 2 : index
    %10 = vector.load %arg10[%c18, %c2_15] : memref<20x20xf32, #tpu.memory_space<vmem>>, vector<2x16xf32>
    tpu.vector_store %arg10[%c18, %c2_15], %9 {strides = array<i32>} : memref<20x20xf32, #tpu.memory_space<vmem>>, vector<2x16xf32>,
    %c0_16 = arith.constant 0 : index
    %c0_17 = arith.constant 0 : index
    %11 = vector.load %arg10[%c0_16, %c0_17] : memref<20x20xf32, #tpu.memory_space<vmem>>, vector<16x20xf32>
    %c1 = arith.constant 1 : index
    %c0_18 = arith.constant 0 : index
    %12 = vector.load %arg10[%c1, %c0_18] : memref<20x20xf32, #tpu.memory_space<vmem>>, vector<16x20xf32>
    %c2_19 = arith.constant 2 : index
    %c0_20 = arith.constant 0 : index
    %13 = vector.load %arg10[%c2_19, %c0_20] : memref<20x20xf32, #tpu.memory_space<vmem>>, vector<16x20xf32>
    %c3 = arith.constant 3 : index
    %c0_21 = arith.constant 0 : index
    %14 = vector.load %arg10[%c3, %c0_21] : memref<20x20xf32, #tpu.memory_space<vmem>>, vector<16x20xf32>
    %c4 = arith.constant 4 : index
    %c0_22 = arith.constant 0 : index
    %15 = vector.load %arg10[%c4, %c0_22] : memref<20x20xf32, #tpu.memory_space<vmem>>, vector<16x20xf32>
    %16 = arith.addf %11, %12 : vector<16x20xf32>
    %17 = arith.addf %13, %14 : vector<16x20xf32>
    %18 = arith.addf %16, %17 : vector<16x20xf32>
    %19 = arith.addf %18, %15 : vector<16x20xf32>
    %c0_23 = arith.constant 0 : index
    %c0_24 = arith.constant 0 : index
    %20 = vector.load %arg11[%c0_23, %c0_24] : memref<16x20xf32, #tpu.memory_space<vmem>>, vector<16x20xf32>
    tpu.vector_store %arg11[%c0_23, %c0_24], %19 {strides = array<i32>} : memref<16x20xf32, #tpu.memory_space<vmem>>, vector<16x20xf32>,
    %c0_25 = arith.constant 0 : index
    %c0_26 = arith.constant 0 : index
    %21 = vector.load %arg11[%c0_25, %c0_26] : memref<16x20xf32, #tpu.memory_space<vmem>>, vector<16x16xf32>
    %c0_27 = arith.constant 0 : index
    %c1_28 = arith.constant 1 : index
    %22 = vector.load %arg11[%c0_27, %c1_28] : memref<16x20xf32, #tpu.memory_space<vmem>>, vector<16x16xf32>
    %c0_29 = arith.constant 0 : index
    %c2_30 = arith.constant 2 : index
    %23 = vector.load %arg11[%c0_29, %c2_30] : memref<16x20xf32, #tpu.memory_space<vmem>>, vector<16x16xf32>
    %c0_31 = arith.constant 0 : index
    %c3_32 = arith.constant 3 : index
    %24 = vector.load %arg11[%c0_31, %c3_32] : memref<16x20xf32, #tpu.memory_space<vmem>>, vector<16x16xf32>
    %c0_33 = arith.constant 0 : index
    %c4_34 = arith.constant 4 : index
    %25 = vector.load %arg11[%c0_33, %c4_34] : memref<16x20xf32, #tpu.memory_space<vmem>>, vector<16x16xf32>
    %26 = arith.addf %21, %22 : vector<16x16xf32>
    %27 = arith.addf %23, %24 : vector<16x16xf32>
    %28 = arith.addf %26, %27 : vector<16x16xf32>
    %29 = arith.addf %28, %25 : vector<16x16xf32>
    %cst_35 = arith.constant 4.000000e-02 : f32
    %30 = vector.broadcast %cst_35 : f32 to vector<16x16xf32>
    %31 = arith.mulf %29, %30 : vector<16x16xf32>
    %c0_36 = arith.constant 0 : index
    %c0_37 = arith.constant 0 : index
    %c0_38 = arith.constant 0 : index
    %32 = vector.load %arg8[%c0_36, %c0_37, %c0_38] : memref<1x16x16xf32, #tpu.memory_space<vmem>>, vector<1x16x16xf32>
    %33 = vector.shape_cast %32 : vector<1x16x16xf32> to vector<16x16xf32>
    %34 = vector.shape_cast %31 : vector<16x16xf32> to vector<1x16x16xf32>
    tpu.vector_store %arg8[%c0_36, %c0_37, %c0_38], %34 {strides = array<i32>} : memref<1x16x16xf32, #tpu.memory_space<vmem>>, vector<1x16x16xf32>,
    %cst_39 = arith.constant 0.000000e+00 : f32
    %35 = vector.broadcast %cst_39 : f32 to vector<20x20xf32>
    %c0_40 = arith.constant 0 : index
    %c0_41 = arith.constant 0 : index
    %36 = vector.load %arg10[%c0_40, %c0_41] : memref<20x20xf32, #tpu.memory_space<vmem>>, vector<20x20xf32>
    tpu.vector_store %arg10[%c0_40, %c0_41], %35 {strides = array<i32>} : memref<20x20xf32, #tpu.memory_space<vmem>>, vector<20x20xf32>,
    %c0_42 = arith.constant 0 : index
    %c0_43 = arith.constant 0 : index
    %c0_44 = arith.constant 0 : index
    %c0_45 = arith.constant 0 : index
    %37 = vector.load %arg6[%c0_42, %c0_43, %c0_44, %c0_45] : memref<1x1x2x16xf32, #tpu.memory_space<vmem>>, vector<1x1x2x16xf32>
    %38 = vector.shape_cast %37 : vector<1x1x2x16xf32> to vector<2x16xf32>
    %c0_46 = arith.constant 0 : index
    %c2_47 = arith.constant 2 : index
    %39 = vector.load %arg10[%c0_46, %c2_47] : memref<20x20xf32, #tpu.memory_space<vmem>>, vector<2x16xf32>
    tpu.vector_store %arg10[%c0_46, %c2_47], %38 {strides = array<i32>} : memref<20x20xf32, #tpu.memory_space<vmem>>, vector<2x16xf32>,
    %c0_48 = arith.constant 0 : index
    %c0_49 = arith.constant 0 : index
    %c0_50 = arith.constant 0 : index
    %40 = vector.load %arg5[%c0_48, %c0_49, %c0_50] : memref<1x16x16xf32, #tpu.memory_space<vmem>>, vector<1x16x16xf32>
    %41 = vector.shape_cast %40 : vector<1x16x16xf32> to vector<16x16xf32>
    %c2_51 = arith.constant 2 : index
    %c2_52 = arith.constant 2 : index
    %42 = vector.load %arg10[%c2_51, %c2_52] : memref<20x20xf32, #tpu.memory_space<vmem>>, vector<16x16xf32>
    tpu.vector_store %arg10[%c2_51, %c2_52], %41 {strides = array<i32>} : memref<20x20xf32, #tpu.memory_space<vmem>>, vector<16x16xf32>,
    %c0_53 = arith.constant 0 : index
    %c0_54 = arith.constant 0 : index
    %c0_55 = arith.constant 0 : index
    %c0_56 = arith.constant 0 : index
    %43 = vector.load %arg7[%c0_53, %c0_54, %c0_55, %c0_56] : memref<1x1x2x16xf32, #tpu.memory_space<vmem>>, vector<1x1x2x16xf32>
    %44 = vector.shape_cast %43 : vector<1x1x2x16xf32> to vector<2x16xf32>
    %c18_57 = arith.constant 18 : index
    %c2_58 = arith.constant 2 : index
    %45 = vector.load %arg10[%c18_57, %c2_58] : memref<20x20xf32, #tpu.memory_space<vmem>>, vector<2x16xf32>
    tpu.vector_store %arg10[%c18_57, %c2_58], %44 {strides = array<i32>} : memref<20x20xf32, #tpu.memory_space<vmem>>, vector<2x16xf32>,
    %c0_59 = arith.constant 0 : index
    %c0_60 = arith.constant 0 : index
    %46 = vector.load %arg10[%c0_59, %c0_60] : memref<20x20xf32, #tpu.memory_space<vmem>>, vector<16x20xf32>
    %c1_61 = arith.constant 1 : index
    %c0_62 = arith.constant 0 : index
    %47 = vector.load %arg10[%c1_61, %c0_62] : memref<20x20xf32, #tpu.memory_space<vmem>>, vector<16x20xf32>
    %c2_63 = arith.constant 2 : index
    %c0_64 = arith.constant 0 : index
    %48 = vector.load %arg10[%c2_63, %c0_64] : memref<20x20xf32, #tpu.memory_space<vmem>>, vector<16x20xf32>
    %c3_65 = arith.constant 3 : index
    %c0_66 = arith.constant 0 : index
    %49 = vector.load %arg10[%c3_65, %c0_66] : memref<20x20xf32, #tpu.memory_space<vmem>>, vector<16x20xf32>
    %c4_67 = arith.constant 4 : index
    %c0_68 = arith.constant 0 : index
    %50 = vector.load %arg10[%c4_67, %c0_68] : memref<20x20xf32, #tpu.memory_space<vmem>>, vector<16x20xf32>
    %51 = arith.addf %46, %47 : vector<16x20xf32>
    %52 = arith.addf %48, %49 : vector<16x20xf32>
    %53 = arith.addf %51, %52 : vector<16x20xf32>
    %54 = arith.addf %53, %50 : vector<16x20xf32>
    %c0_69 = arith.constant 0 : index
    %c0_70 = arith.constant 0 : index
    %55 = vector.load %arg11[%c0_69, %c0_70] : memref<16x20xf32, #tpu.memory_space<vmem>>, vector<16x20xf32>
    tpu.vector_store %arg11[%c0_69, %c0_70], %54 {strides = array<i32>} : memref<16x20xf32, #tpu.memory_space<vmem>>, vector<16x20xf32>,
    %c0_71 = arith.constant 0 : index
    %c0_72 = arith.constant 0 : index
    %56 = vector.load %arg11[%c0_71, %c0_72] : memref<16x20xf32, #tpu.memory_space<vmem>>, vector<16x16xf32>
    %c0_73 = arith.constant 0 : index
    %c1_74 = arith.constant 1 : index
    %57 = vector.load %arg11[%c0_73, %c1_74] : memref<16x20xf32, #tpu.memory_space<vmem>>, vector<16x16xf32>
    %c0_75 = arith.constant 0 : index
    %c2_76 = arith.constant 2 : index
    %58 = vector.load %arg11[%c0_75, %c2_76] : memref<16x20xf32, #tpu.memory_space<vmem>>, vector<16x16xf32>
    %c0_77 = arith.constant 0 : index
    %c3_78 = arith.constant 3 : index
    %59 = vector.load %arg11[%c0_77, %c3_78] : memref<16x20xf32, #tpu.memory_space<vmem>>, vector<16x16xf32>
    %c0_79 = arith.constant 0 : index
    %c4_80 = arith.constant 4 : index
    %60 = vector.load %arg11[%c0_79, %c4_80] : memref<16x20xf32, #tpu.memory_space<vmem>>, vector<16x16xf32>
    %61 = arith.addf %56, %57 : vector<16x16xf32>
    %62 = arith.addf %58, %59 : vector<16x16xf32>
    %63 = arith.addf %61, %62 : vector<16x16xf32>
    %64 = arith.addf %63, %60 : vector<16x16xf32>
    %cst_81 = arith.constant 4.000000e-02 : f32
    %65 = vector.broadcast %cst_81 : f32 to vector<16x16xf32>
    %66 = arith.mulf %64, %65 : vector<16x16xf32>
    %c0_82 = arith.constant 0 : index
    %c0_83 = arith.constant 0 : index
    %c0_84 = arith.constant 0 : index
    %67 = vector.load %arg9[%c0_82, %c0_83, %c0_84] : memref<1x16x16xf32, #tpu.memory_space<vmem>>, vector<1x16x16xf32>
    %68 = vector.shape_cast %67 : vector<1x16x16xf32> to vector<16x16xf32>
    %69 = vector.shape_cast %66 : vector<16x16xf32> to vector<1x16x16xf32>
    tpu.vector_store %arg9[%c0_82, %c0_83, %c0_84], %69 {strides = array<i32>} : memref<1x16x16xf32, #tpu.memory_space<vmem>>, vector<1x16x16xf32>,
    return
  }
  func.func @transform_0(%arg0: i32, %arg1: i32) -> (i32, i32, i32) {
    %c0_i32 = arith.constant 0 : i32
    %c0_i32_0 = arith.constant 0 : i32
    return %arg0, %arg1, %c0_i32 : i32, i32, i32
  }
  func.func @transform_1(%arg0: i32, %arg1: i32) -> (i32, i32, i32, i32) {
    %c0_i32 = arith.constant 0 : i32
    %c0_i32_0 = arith.constant 0 : i32
    %c0_i32_1 = arith.constant 0 : i32
    return %arg0, %arg1, %c0_i32, %c0_i32_0 : i32, i32, i32, i32
  }
  func.func @transform_2(%arg0: i32, %arg1: i32) -> (i32, i32, i32, i32) {
    %c0_i32 = arith.constant 0 : i32
    %c0_i32_0 = arith.constant 0 : i32
    %c0_i32_1 = arith.constant 0 : i32
    return %arg0, %arg1, %c0_i32, %c0_i32_0 : i32, i32, i32, i32
  }
  func.func @transform_3(%arg0: i32, %arg1: i32) -> (i32, i32, i32) {
    %c0_i32 = arith.constant 0 : i32
    %c0_i32_0 = arith.constant 0 : i32
    return %arg0, %arg1, %c0_i32 : i32, i32, i32
  }
  func.func @transform_4(%arg0: i32, %arg1: i32) -> (i32, i32, i32, i32) {
    %c0_i32 = arith.constant 0 : i32
    %c0_i32_0 = arith.constant 0 : i32
    %c0_i32_1 = arith.constant 0 : i32
    return %arg0, %arg1, %c0_i32, %c0_i32_0 : i32, i32, i32, i32
  }
  func.func @transform_5(%arg0: i32, %arg1: i32) -> (i32, i32, i32, i32) {
    %c0_i32 = arith.constant 0 : i32
    %c0_i32_0 = arith.constant 0 : i32
    %c0_i32_1 = arith.constant 0 : i32
    return %arg0, %arg1, %c0_i32, %c0_i32_0 : i32, i32, i32, i32
  }
  func.func @transform_6(%arg0: i32, %arg1: i32) -> (i32, i32, i32) {
    %c0_i32 = arith.constant 0 : i32
    %c0_i32_0 = arith.constant 0 : i32
    return %arg0, %arg1, %c0_i32 : i32, i32, i32
  }
  func.func @transform_7(%arg0: i32, %arg1: i32) -> (i32, i32, i32) {
    %c0_i32 = arith.constant 0 : i32
    %c0_i32_0 = arith.constant 0 : i32
    return %arg0, %arg1, %c0_i32 : i32, i32, i32
  }
}

module attributes {stable_mosaic.version = 11 : i64} {
  func.func @_mask_kernel(%arg0: i32, %arg1: i32, %arg2: memref<4xf32, #tpu.memory_space<smem>>, %arg3: memref<1x3x16x16xf32, #tpu.memory_space<vmem>>, %arg4: memref<1x3x16x16xf32, #tpu.memory_space<vmem>>, %arg5: memref<1x16x16xf32, #tpu.memory_space<vmem>>) attributes {dimension_semantics = [#tpu.dimension_semantics<parallel>, #tpu.dimension_semantics<parallel>], iteration_bounds = array<i64: 2, 1>, scalar_prefetch = 0 : i64, scratch_operands = 0 : i64, tpu.core_type = #tpu.core_type<tc>, window_params = [{transform_indices = @transform_0, window_bounds = array<i64: 4>}, {transform_indices = @transform_1, window_bounds = array<i64: 1, 3, 16, 16>}, {transform_indices = @transform_2, window_bounds = array<i64: 1, 3, 16, 16>}, {transform_indices = @transform_3, window_bounds = array<i64: 1, 16, 16>}]} {
    %c0 = arith.constant 0 : index
    %0 = memref.load %arg2[%c0] : memref<4xf32, #tpu.memory_space<smem>>
    %c1 = arith.constant 1 : index
    %1 = memref.load %arg2[%c1] : memref<4xf32, #tpu.memory_space<smem>>
    %c2 = arith.constant 2 : index
    %2 = memref.load %arg2[%c2] : memref<4xf32, #tpu.memory_space<smem>>
    %c3 = arith.constant 3 : index
    %3 = memref.load %arg2[%c3] : memref<4xf32, #tpu.memory_space<smem>>
    %c0_0 = arith.constant 0 : index
    %c0_1 = arith.constant 0 : index
    %c0_2 = arith.constant 0 : index
    %c0_3 = arith.constant 0 : index
    %4 = vector.load %arg3[%c0_0, %c0_1, %c0_2, %c0_3] : memref<1x3x16x16xf32, #tpu.memory_space<vmem>>, vector<1x3x16x16xf32>
    %5 = vector.shape_cast %4 : vector<1x3x16x16xf32> to vector<3x16x16xf32>
    %c0_4 = arith.constant 0 : index
    %c0_5 = arith.constant 0 : index
    %c0_6 = arith.constant 0 : index
    %c0_7 = arith.constant 0 : index
    %6 = vector.load %arg4[%c0_4, %c0_5, %c0_6, %c0_7] : memref<1x3x16x16xf32, #tpu.memory_space<vmem>>, vector<1x3x16x16xf32>
    %7 = vector.shape_cast %6 : vector<1x3x16x16xf32> to vector<3x16x16xf32>
    %8 = vector.broadcast %0 : f32 to vector<3x16x16xf32>
    %9 = arith.mulf %5, %8 : vector<3x16x16xf32>
    %cst = arith.constant 0.000000e+00 : f32
    %cst_8 = arith.constant 1.000000e+00 : f32
    %10 = vector.broadcast %cst : f32 to vector<3x16x16xf32>
    %11 = arith.maximumf %10, %9 : vector<3x16x16xf32>
    %12 = vector.broadcast %cst_8 : f32 to vector<3x16x16xf32>
    %13 = arith.minimumf %12, %11 : vector<3x16x16xf32>
    %14 = vector.broadcast %1 : f32 to vector<3x16x16xf32>
    %15 = arith.subf %13, %14 : vector<3x16x16xf32>
    %16 = vector.broadcast %2 : f32 to vector<3x16x16xf32>
    %17 = arith.mulf %15, %16 : vector<3x16x16xf32>
    %18 = vector.broadcast %3 : f32 to vector<3x16x16xf32>
    %19 = arith.addf %17, %18 : vector<3x16x16xf32>
    %20 = arith.subf %19, %7 : vector<3x16x16xf32>
    %21 = math.absf %20 : vector<3x16x16xf32>
    %cst_9 = arith.constant 3.000000e-01 : f32
    %22 = vector.broadcast %cst_9 : f32 to vector<3x16x16xf32>
    %23 = arith.cmpf ogt, %21, %22 : vector<3x16x16xf32>
    %24 = arith.extui %23 : vector<3x16x16xi1> to vector<3x16x16xi32>
    %25 = arith.sitofp %24 : vector<3x16x16xi32> to vector<3x16x16xf32>
    %cst_10 = arith.constant dense<0xFF800000> : vector<16x16xf32>
    %26 = vector.multi_reduction <maximumf>, %25, %cst_10 [0] : vector<3x16x16xf32> to vector<16x16xf32>
    %c0_11 = arith.constant 0 : index
    %c0_12 = arith.constant 0 : index
    %c0_13 = arith.constant 0 : index
    %27 = vector.load %arg5[%c0_11, %c0_12, %c0_13] : memref<1x16x16xf32, #tpu.memory_space<vmem>>, vector<1x16x16xf32>
    %28 = vector.shape_cast %27 : vector<1x16x16xf32> to vector<16x16xf32>
    %29 = vector.shape_cast %26 : vector<16x16xf32> to vector<1x16x16xf32>
    tpu.vector_store %arg5[%c0_11, %c0_12, %c0_13], %29 {strides = array<i32>} : memref<1x16x16xf32, #tpu.memory_space<vmem>>, vector<1x16x16xf32>,
    return
  }
  func.func @transform_0(%arg0: i32, %arg1: i32) -> i32 {
    %c0_i32 = arith.constant 0 : i32
    %c0_i32_0 = arith.constant 0 : i32
    return %c0_i32 : i32
  }
  func.func @transform_1(%arg0: i32, %arg1: i32) -> (i32, i32, i32, i32) {
    %c0_i32 = arith.constant 0 : i32
    %c0_i32_0 = arith.constant 0 : i32
    %c0_i32_1 = arith.constant 0 : i32
    return %arg0, %c0_i32, %arg1, %c0_i32_0 : i32, i32, i32, i32
  }
  func.func @transform_2(%arg0: i32, %arg1: i32) -> (i32, i32, i32, i32) {
    %c0_i32 = arith.constant 0 : i32
    %c0_i32_0 = arith.constant 0 : i32
    %c0_i32_1 = arith.constant 0 : i32
    return %arg0, %c0_i32, %arg1, %c0_i32_0 : i32, i32, i32, i32
  }
  func.func @transform_3(%arg0: i32, %arg1: i32) -> (i32, i32, i32) {
    %c0_i32 = arith.constant 0 : i32
    %c0_i32_0 = arith.constant 0 : i32
    return %arg0, %arg1, %c0_i32 : i32, i32, i32
  }
}

module attributes {stable_mosaic.version = 11 : i64} {
  func.func @_erode_dilate_kernel(%arg0: i32, %arg1: i32, %arg2: memref<1x16x16xf32, #tpu.memory_space<vmem>>, %arg3: memref<1x1x10x16xf32, #tpu.memory_space<vmem>>, %arg4: memref<1x1x10x16xf32, #tpu.memory_space<vmem>>, %arg5: memref<1x16x16xf32, #tpu.memory_space<vmem>>, %arg6: memref<1x16x16xf32, #tpu.memory_space<vmem>>, %arg7: memref<36x26xf32, #tpu.memory_space<vmem>>, %arg8: memref<26x26xf32, #tpu.memory_space<vmem>>, %arg9: memref<26x26xf32, #tpu.memory_space<vmem>>, %arg10: memref<16x26xf32, #tpu.memory_space<vmem>>) attributes {dimension_semantics = [#tpu.dimension_semantics<parallel>, #tpu.dimension_semantics<parallel>], iteration_bounds = array<i64: 2, 1>, scalar_prefetch = 0 : i64, scratch_operands = 4 : i64, tpu.core_type = #tpu.core_type<tc>, window_params = [{transform_indices = @transform_0, window_bounds = array<i64: 1, 16, 16>}, {transform_indices = @transform_1, window_bounds = array<i64: 1, 1, 10, 16>}, {transform_indices = @transform_2, window_bounds = array<i64: 1, 1, 10, 16>}, {transform_indices = @transform_3, window_bounds = array<i64: 1, 16, 16>}, {transform_indices = @transform_4, window_bounds = array<i64: 1, 16, 16>}]} {
    %cst = arith.constant 1.000000e+00 : f32
    %0 = vector.broadcast %cst : f32 to vector<36x26xf32>
    %c0 = arith.constant 0 : index
    %c0_0 = arith.constant 0 : index
    %1 = vector.load %arg7[%c0, %c0_0] : memref<36x26xf32, #tpu.memory_space<vmem>>, vector<36x26xf32>
    tpu.vector_store %arg7[%c0, %c0_0], %0 {strides = array<i32>} : memref<36x26xf32, #tpu.memory_space<vmem>>, vector<36x26xf32>,
    %c0_1 = arith.constant 0 : index
    %c0_2 = arith.constant 0 : index
    %c0_3 = arith.constant 0 : index
    %c0_4 = arith.constant 0 : index
    %2 = vector.load %arg3[%c0_1, %c0_2, %c0_3, %c0_4] : memref<1x1x10x16xf32, #tpu.memory_space<vmem>>, vector<1x1x10x16xf32>
    %3 = vector.shape_cast %2 : vector<1x1x10x16xf32> to vector<10x16xf32>
    %c0_5 = arith.constant 0 : index
    %c5 = arith.constant 5 : index
    %4 = vector.load %arg7[%c0_5, %c5] : memref<36x26xf32, #tpu.memory_space<vmem>>, vector<10x16xf32>
    tpu.vector_store %arg7[%c0_5, %c5], %3 {strides = array<i32>} : memref<36x26xf32, #tpu.memory_space<vmem>>, vector<10x16xf32>,
    %c0_6 = arith.constant 0 : index
    %c0_7 = arith.constant 0 : index
    %c0_8 = arith.constant 0 : index
    %5 = vector.load %arg2[%c0_6, %c0_7, %c0_8] : memref<1x16x16xf32, #tpu.memory_space<vmem>>, vector<1x16x16xf32>
    %6 = vector.shape_cast %5 : vector<1x16x16xf32> to vector<16x16xf32>
    %c10 = arith.constant 10 : index
    %c5_9 = arith.constant 5 : index
    %7 = vector.load %arg7[%c10, %c5_9] : memref<36x26xf32, #tpu.memory_space<vmem>>, vector<16x16xf32>
    tpu.vector_store %arg7[%c10, %c5_9], %6 {strides = array<i32>} : memref<36x26xf32, #tpu.memory_space<vmem>>, vector<16x16xf32>,
    %c0_10 = arith.constant 0 : index
    %c0_11 = arith.constant 0 : index
    %c0_12 = arith.constant 0 : index
    %c0_13 = arith.constant 0 : index
    %8 = vector.load %arg4[%c0_10, %c0_11, %c0_12, %c0_13] : memref<1x1x10x16xf32, #tpu.memory_space<vmem>>, vector<1x1x10x16xf32>
    %9 = vector.shape_cast %8 : vector<1x1x10x16xf32> to vector<10x16xf32>
    %c26 = arith.constant 26 : index
    %c5_14 = arith.constant 5 : index
    %10 = vector.load %arg7[%c26, %c5_14] : memref<36x26xf32, #tpu.memory_space<vmem>>, vector<10x16xf32>
    tpu.vector_store %arg7[%c26, %c5_14], %9 {strides = array<i32>} : memref<36x26xf32, #tpu.memory_space<vmem>>, vector<10x16xf32>,
    %c0_15 = arith.constant 0 : index
    %c0_16 = arith.constant 0 : index
    %11 = vector.load %arg7[%c0_15, %c0_16] : memref<36x26xf32, #tpu.memory_space<vmem>>, vector<26x26xf32>
    %c1 = arith.constant 1 : index
    %c0_17 = arith.constant 0 : index
    %12 = vector.load %arg7[%c1, %c0_17] : memref<36x26xf32, #tpu.memory_space<vmem>>, vector<26x26xf32>
    %c2 = arith.constant 2 : index
    %c0_18 = arith.constant 0 : index
    %13 = vector.load %arg7[%c2, %c0_18] : memref<36x26xf32, #tpu.memory_space<vmem>>, vector<26x26xf32>
    %c3 = arith.constant 3 : index
    %c0_19 = arith.constant 0 : index
    %14 = vector.load %arg7[%c3, %c0_19] : memref<36x26xf32, #tpu.memory_space<vmem>>, vector<26x26xf32>
    %c4 = arith.constant 4 : index
    %c0_20 = arith.constant 0 : index
    %15 = vector.load %arg7[%c4, %c0_20] : memref<36x26xf32, #tpu.memory_space<vmem>>, vector<26x26xf32>
    %c5_21 = arith.constant 5 : index
    %c0_22 = arith.constant 0 : index
    %16 = vector.load %arg7[%c5_21, %c0_22] : memref<36x26xf32, #tpu.memory_space<vmem>>, vector<26x26xf32>
    %c6 = arith.constant 6 : index
    %c0_23 = arith.constant 0 : index
    %17 = vector.load %arg7[%c6, %c0_23] : memref<36x26xf32, #tpu.memory_space<vmem>>, vector<26x26xf32>
    %c7 = arith.constant 7 : index
    %c0_24 = arith.constant 0 : index
    %18 = vector.load %arg7[%c7, %c0_24] : memref<36x26xf32, #tpu.memory_space<vmem>>, vector<26x26xf32>
    %c8 = arith.constant 8 : index
    %c0_25 = arith.constant 0 : index
    %19 = vector.load %arg7[%c8, %c0_25] : memref<36x26xf32, #tpu.memory_space<vmem>>, vector<26x26xf32>
    %c9 = arith.constant 9 : index
    %c0_26 = arith.constant 0 : index
    %20 = vector.load %arg7[%c9, %c0_26] : memref<36x26xf32, #tpu.memory_space<vmem>>, vector<26x26xf32>
    %c10_27 = arith.constant 10 : index
    %c0_28 = arith.constant 0 : index
    %21 = vector.load %arg7[%c10_27, %c0_28] : memref<36x26xf32, #tpu.memory_space<vmem>>, vector<26x26xf32>
    %22 = arith.minimumf %11, %12 : vector<26x26xf32>
    %23 = arith.minimumf %13, %14 : vector<26x26xf32>
    %24 = arith.minimumf %15, %16 : vector<26x26xf32>
    %25 = arith.minimumf %17, %18 : vector<26x26xf32>
    %26 = arith.minimumf %19, %20 : vector<26x26xf32>
    %27 = arith.minimumf %22, %23 : vector<26x26xf32>
    %28 = arith.minimumf %24, %25 : vector<26x26xf32>
    %29 = arith.minimumf %26, %21 : vector<26x26xf32>
    %30 = arith.minimumf %27, %28 : vector<26x26xf32>
    %31 = arith.minimumf %30, %29 : vector<26x26xf32>
    %c0_29 = arith.constant 0 : index
    %c0_30 = arith.constant 0 : index
    %32 = vector.load %arg8[%c0_29, %c0_30] : memref<26x26xf32, #tpu.memory_space<vmem>>, vector<26x26xf32>
    tpu.vector_store %arg8[%c0_29, %c0_30], %31 {strides = array<i32>} : memref<26x26xf32, #tpu.memory_space<vmem>>, vector<26x26xf32>,
    %c0_31 = arith.constant 0 : index
    %c0_32 = arith.constant 0 : index
    %33 = vector.load %arg8[%c0_31, %c0_32] : memref<26x26xf32, #tpu.memory_space<vmem>>, vector<26x16xf32>
    %c0_33 = arith.constant 0 : index
    %c1_34 = arith.constant 1 : index
    %34 = vector.load %arg8[%c0_33, %c1_34] : memref<26x26xf32, #tpu.memory_space<vmem>>, vector<26x16xf32>
    %c0_35 = arith.constant 0 : index
    %c2_36 = arith.constant 2 : index
    %35 = vector.load %arg8[%c0_35, %c2_36] : memref<26x26xf32, #tpu.memory_space<vmem>>, vector<26x16xf32>
    %c0_37 = arith.constant 0 : index
    %c3_38 = arith.constant 3 : index
    %36 = vector.load %arg8[%c0_37, %c3_38] : memref<26x26xf32, #tpu.memory_space<vmem>>, vector<26x16xf32>
    %c0_39 = arith.constant 0 : index
    %c4_40 = arith.constant 4 : index
    %37 = vector.load %arg8[%c0_39, %c4_40] : memref<26x26xf32, #tpu.memory_space<vmem>>, vector<26x16xf32>
    %c0_41 = arith.constant 0 : index
    %c5_42 = arith.constant 5 : index
    %38 = vector.load %arg8[%c0_41, %c5_42] : memref<26x26xf32, #tpu.memory_space<vmem>>, vector<26x16xf32>
    %c0_43 = arith.constant 0 : index
    %c6_44 = arith.constant 6 : index
    %39 = vector.load %arg8[%c0_43, %c6_44] : memref<26x26xf32, #tpu.memory_space<vmem>>, vector<26x16xf32>
    %c0_45 = arith.constant 0 : index
    %c7_46 = arith.constant 7 : index
    %40 = vector.load %arg8[%c0_45, %c7_46] : memref<26x26xf32, #tpu.memory_space<vmem>>, vector<26x16xf32>
    %c0_47 = arith.constant 0 : index
    %c8_48 = arith.constant 8 : index
    %41 = vector.load %arg8[%c0_47, %c8_48] : memref<26x26xf32, #tpu.memory_space<vmem>>, vector<26x16xf32>
    %c0_49 = arith.constant 0 : index
    %c9_50 = arith.constant 9 : index
    %42 = vector.load %arg8[%c0_49, %c9_50] : memref<26x26xf32, #tpu.memory_space<vmem>>, vector<26x16xf32>
    %c0_51 = arith.constant 0 : index
    %c10_52 = arith.constant 10 : index
    %43 = vector.load %arg8[%c0_51, %c10_52] : memref<26x26xf32, #tpu.memory_space<vmem>>, vector<26x16xf32>
    %44 = arith.minimumf %33, %34 : vector<26x16xf32>
    %45 = arith.minimumf %35, %36 : vector<26x16xf32>
    %46 = arith.minimumf %37, %38 : vector<26x16xf32>
    %47 = arith.minimumf %39, %40 : vector<26x16xf32>
    %48 = arith.minimumf %41, %42 : vector<26x16xf32>
    %49 = arith.minimumf %44, %45 : vector<26x16xf32>
    %50 = arith.minimumf %46, %47 : vector<26x16xf32>
    %51 = arith.minimumf %48, %43 : vector<26x16xf32>
    %52 = arith.minimumf %49, %50 : vector<26x16xf32>
    %53 = arith.minimumf %52, %51 : vector<26x16xf32>
    %c16_i32 = arith.constant 16 : i32
    %54 = arith.muli %arg1, %c16_i32 : i32
    %55 = tpu.iota {dimensions = array<i32: 0>} : vector<26x16xi32>
    %c5_i32 = arith.constant 5 : i32
    %56 = arith.subi %54, %c5_i32 : i32
    %57 = vector.broadcast %56 : i32 to vector<26x16xi32>
    %58 = arith.addi %55, %57 : vector<26x16xi32>
    %c0_i32 = arith.constant 0 : i32
    %59 = vector.broadcast %c0_i32 : i32 to vector<26x16xi32>
    %60 = arith.cmpi sge, %58, %59 : vector<26x16xi32>
    %c16_i32_53 = arith.constant 16 : i32
    %61 = vector.broadcast %c16_i32_53 : i32 to vector<26x16xi32>
    %62 = arith.cmpi slt, %58, %61 : vector<26x16xi32>
    %63 = arith.andi %60, %62 : vector<26x16xi1>
    %cst_54 = arith.constant 0.000000e+00 : f32
    %64 = vector.broadcast %cst_54 : f32 to vector<26x16xf32>
    %65 = arith.select %63, %53, %64 : vector<26x16xi1>, vector<26x16xf32>
    %cst_55 = arith.constant 0.000000e+00 : f32
    %66 = vector.broadcast %cst_55 : f32 to vector<26x26xf32>
    %c0_56 = arith.constant 0 : index
    %c0_57 = arith.constant 0 : index
    %67 = vector.load %arg9[%c0_56, %c0_57] : memref<26x26xf32, #tpu.memory_space<vmem>>, vector<26x26xf32>
    tpu.vector_store %arg9[%c0_56, %c0_57], %66 {strides = array<i32>} : memref<26x26xf32, #tpu.memory_space<vmem>>, vector<26x26xf32>,
    %c0_58 = arith.constant 0 : index
    %c5_59 = arith.constant 5 : index
    %68 = vector.load %arg9[%c0_58, %c5_59] : memref<26x26xf32, #tpu.memory_space<vmem>>, vector<26x16xf32>
    tpu.vector_store %arg9[%c0_58, %c5_59], %65 {strides = array<i32>} : memref<26x26xf32, #tpu.memory_space<vmem>>, vector<26x16xf32>,
    %c0_60 = arith.constant 0 : index
    %c0_61 = arith.constant 0 : index
    %69 = vector.load %arg9[%c0_60, %c0_61] : memref<26x26xf32, #tpu.memory_space<vmem>>, vector<16x26xf32>
    %c1_62 = arith.constant 1 : index
    %c0_63 = arith.constant 0 : index
    %70 = vector.load %arg9[%c1_62, %c0_63] : memref<26x26xf32, #tpu.memory_space<vmem>>, vector<16x26xf32>
    %c2_64 = arith.constant 2 : index
    %c0_65 = arith.constant 0 : index
    %71 = vector.load %arg9[%c2_64, %c0_65] : memref<26x26xf32, #tpu.memory_space<vmem>>, vector<16x26xf32>
    %c3_66 = arith.constant 3 : index
    %c0_67 = arith.constant 0 : index
    %72 = vector.load %arg9[%c3_66, %c0_67] : memref<26x26xf32, #tpu.memory_space<vmem>>, vector<16x26xf32>
    %c4_68 = arith.constant 4 : index
    %c0_69 = arith.constant 0 : index
    %73 = vector.load %arg9[%c4_68, %c0_69] : memref<26x26xf32, #tpu.memory_space<vmem>>, vector<16x26xf32>
    %c5_70 = arith.constant 5 : index
    %c0_71 = arith.constant 0 : index
    %74 = vector.load %arg9[%c5_70, %c0_71] : memref<26x26xf32, #tpu.memory_space<vmem>>, vector<16x26xf32>
    %c6_72 = arith.constant 6 : index
    %c0_73 = arith.constant 0 : index
    %75 = vector.load %arg9[%c6_72, %c0_73] : memref<26x26xf32, #tpu.memory_space<vmem>>, vector<16x26xf32>
    %c7_74 = arith.constant 7 : index
    %c0_75 = arith.constant 0 : index
    %76 = vector.load %arg9[%c7_74, %c0_75] : memref<26x26xf32, #tpu.memory_space<vmem>>, vector<16x26xf32>
    %c8_76 = arith.constant 8 : index
    %c0_77 = arith.constant 0 : index
    %77 = vector.load %arg9[%c8_76, %c0_77] : memref<26x26xf32, #tpu.memory_space<vmem>>, vector<16x26xf32>
    %c9_78 = arith.constant 9 : index
    %c0_79 = arith.constant 0 : index
    %78 = vector.load %arg9[%c9_78, %c0_79] : memref<26x26xf32, #tpu.memory_space<vmem>>, vector<16x26xf32>
    %c10_80 = arith.constant 10 : index
    %c0_81 = arith.constant 0 : index
    %79 = vector.load %arg9[%c10_80, %c0_81] : memref<26x26xf32, #tpu.memory_space<vmem>>, vector<16x26xf32>
    %80 = arith.maximumf %69, %70 : vector<16x26xf32>
    %81 = arith.maximumf %71, %72 : vector<16x26xf32>
    %82 = arith.maximumf %73, %74 : vector<16x26xf32>
    %83 = arith.maximumf %75, %76 : vector<16x26xf32>
    %84 = arith.maximumf %77, %78 : vector<16x26xf32>
    %85 = arith.maximumf %80, %81 : vector<16x26xf32>
    %86 = arith.maximumf %82, %83 : vector<16x26xf32>
    %87 = arith.maximumf %84, %79 : vector<16x26xf32>
    %88 = arith.maximumf %85, %86 : vector<16x26xf32>
    %89 = arith.maximumf %88, %87 : vector<16x26xf32>
    %c0_82 = arith.constant 0 : index
    %c0_83 = arith.constant 0 : index
    %90 = vector.load %arg10[%c0_82, %c0_83] : memref<16x26xf32, #tpu.memory_space<vmem>>, vector<16x26xf32>
    tpu.vector_store %arg10[%c0_82, %c0_83], %89 {strides = array<i32>} : memref<16x26xf32, #tpu.memory_space<vmem>>, vector<16x26xf32>,
    %c0_84 = arith.constant 0 : index
    %c0_85 = arith.constant 0 : index
    %91 = vector.load %arg10[%c0_84, %c0_85] : memref<16x26xf32, #tpu.memory_space<vmem>>, vector<16x16xf32>
    %c0_86 = arith.constant 0 : index
    %c1_87 = arith.constant 1 : index
    %92 = vector.load %arg10[%c0_86, %c1_87] : memref<16x26xf32, #tpu.memory_space<vmem>>, vector<16x16xf32>
    %c0_88 = arith.constant 0 : index
    %c2_89 = arith.constant 2 : index
    %93 = vector.load %arg10[%c0_88, %c2_89] : memref<16x26xf32, #tpu.memory_space<vmem>>, vector<16x16xf32>
    %c0_90 = arith.constant 0 : index
    %c3_91 = arith.constant 3 : index
    %94 = vector.load %arg10[%c0_90, %c3_91] : memref<16x26xf32, #tpu.memory_space<vmem>>, vector<16x16xf32>
    %c0_92 = arith.constant 0 : index
    %c4_93 = arith.constant 4 : index
    %95 = vector.load %arg10[%c0_92, %c4_93] : memref<16x26xf32, #tpu.memory_space<vmem>>, vector<16x16xf32>
    %c0_94 = arith.constant 0 : index
    %c5_95 = arith.constant 5 : index
    %96 = vector.load %arg10[%c0_94, %c5_95] : memref<16x26xf32, #tpu.memory_space<vmem>>, vector<16x16xf32>
    %c0_96 = arith.constant 0 : index
    %c6_97 = arith.constant 6 : index
    %97 = vector.load %arg10[%c0_96, %c6_97] : memref<16x26xf32, #tpu.memory_space<vmem>>, vector<16x16xf32>
    %c0_98 = arith.constant 0 : index
    %c7_99 = arith.constant 7 : index
    %98 = vector.load %arg10[%c0_98, %c7_99] : memref<16x26xf32, #tpu.memory_space<vmem>>, vector<16x16xf32>
    %c0_100 = arith.constant 0 : index
    %c8_101 = arith.constant 8 : index
    %99 = vector.load %arg10[%c0_100, %c8_101] : memref<16x26xf32, #tpu.memory_space<vmem>>, vector<16x16xf32>
    %c0_102 = arith.constant 0 : index
    %c9_103 = arith.constant 9 : index
    %100 = vector.load %arg10[%c0_102, %c9_103] : memref<16x26xf32, #tpu.memory_space<vmem>>, vector<16x16xf32>
    %c0_104 = arith.constant 0 : index
    %c10_105 = arith.constant 10 : index
    %101 = vector.load %arg10[%c0_104, %c10_105] : memref<16x26xf32, #tpu.memory_space<vmem>>, vector<16x16xf32>
    %102 = arith.maximumf %91, %92 : vector<16x16xf32>
    %103 = arith.maximumf %93, %94 : vector<16x16xf32>
    %104 = arith.maximumf %95, %96 : vector<16x16xf32>
    %105 = arith.maximumf %97, %98 : vector<16x16xf32>
    %106 = arith.maximumf %99, %100 : vector<16x16xf32>
    %107 = arith.maximumf %102, %103 : vector<16x16xf32>
    %108 = arith.maximumf %104, %105 : vector<16x16xf32>
    %109 = arith.maximumf %106, %101 : vector<16x16xf32>
    %110 = arith.maximumf %107, %108 : vector<16x16xf32>
    %111 = arith.maximumf %110, %109 : vector<16x16xf32>
    %c0_106 = arith.constant 0 : index
    %c0_107 = arith.constant 0 : index
    %c0_108 = arith.constant 0 : index
    %112 = vector.load %arg5[%c0_106, %c0_107, %c0_108] : memref<1x16x16xf32, #tpu.memory_space<vmem>>, vector<1x16x16xf32>
    %113 = vector.shape_cast %112 : vector<1x16x16xf32> to vector<16x16xf32>
    %114 = vector.shape_cast %111 : vector<16x16xf32> to vector<1x16x16xf32>
    tpu.vector_store %arg5[%c0_106, %c0_107, %c0_108], %114 {strides = array<i32>} : memref<1x16x16xf32, #tpu.memory_space<vmem>>, vector<1x16x16xf32>,
    %cst_109 = arith.constant 1.000000e+00 : f32
    %115 = vector.broadcast %cst_109 : f32 to vector<16x16xf32>
    %116 = arith.subf %115, %111 : vector<16x16xf32>
    %c0_110 = arith.constant 0 : index
    %c0_111 = arith.constant 0 : index
    %c0_112 = arith.constant 0 : index
    %117 = vector.load %arg6[%c0_110, %c0_111, %c0_112] : memref<1x16x16xf32, #tpu.memory_space<vmem>>, vector<1x16x16xf32>
    %118 = vector.shape_cast %117 : vector<1x16x16xf32> to vector<16x16xf32>
    %119 = vector.shape_cast %116 : vector<16x16xf32> to vector<1x16x16xf32>
    tpu.vector_store %arg6[%c0_110, %c0_111, %c0_112], %119 {strides = array<i32>} : memref<1x16x16xf32, #tpu.memory_space<vmem>>, vector<1x16x16xf32>,
    return
  }
  func.func @transform_0(%arg0: i32, %arg1: i32) -> (i32, i32, i32) {
    %c0_i32 = arith.constant 0 : i32
    %c0_i32_0 = arith.constant 0 : i32
    return %arg0, %arg1, %c0_i32 : i32, i32, i32
  }
  func.func @transform_1(%arg0: i32, %arg1: i32) -> (i32, i32, i32, i32) {
    %c0_i32 = arith.constant 0 : i32
    %c0_i32_0 = arith.constant 0 : i32
    %c0_i32_1 = arith.constant 0 : i32
    return %arg0, %arg1, %c0_i32, %c0_i32_0 : i32, i32, i32, i32
  }
  func.func @transform_2(%arg0: i32, %arg1: i32) -> (i32, i32, i32, i32) {
    %c0_i32 = arith.constant 0 : i32
    %c0_i32_0 = arith.constant 0 : i32
    %c0_i32_1 = arith.constant 0 : i32
    return %arg0, %arg1, %c0_i32, %c0_i32_0 : i32, i32, i32, i32
  }
  func.func @transform_3(%arg0: i32, %arg1: i32) -> (i32, i32, i32) {
    %c0_i32 = arith.constant 0 : i32
    %c0_i32_0 = arith.constant 0 : i32
    return %arg0, %arg1, %c0_i32 : i32, i32, i32
  }
  func.func @transform_4(%arg0: i32, %arg1: i32) -> (i32, i32, i32) {
    %c0_i32 = arith.constant 0 : i32
    %c0_i32_0 = arith.constant 0 : i32
    return %arg0, %arg1, %c0_i32 : i32, i32, i32
  }
}

</mosaic_0001>

<llo_original>
// kernel: get_mask.3
$region0: #{get_mask.3}
  #allocation0 [shape = 'u32[]', space=smem, size = 0x4, offset = 0x4, fixed_abs, tag = 'smem constant byte address 0x4 - core index']
  #allocation1 [shape = 'u32[144,128]{1,0:T(1,128)}', space=vmem, size = 0x12000, scoped, tag = 'internal scratch']
  #allocation2 [shape = 'f32[20,20]{1,0:T(8,128)}', space=vmem, size = 0x3000, scoped, tag = 'scratch operand']
  #allocation3 [shape = 'f32[16,20]{1,0:T(8,128)}', space=vmem, size = 0x2000, scoped, tag = 'scratch operand']
  %s0 = inlined_call_operand.hbm [shape: f32[6,16,16], index: 0, kind: input, shape index: {}]
  %s1 = inlined_call_operand.vmem [shape: f32[6,1,2,16], index: 1, kind: input, shape index: {}, may-alias: {1,2,4,5}]
  %s2 = inlined_call_operand.vmem [shape: f32[6,1,2,16], index: 2, kind: input, shape index: {}, may-alias: {1,2,4,5}]
  %s3 = inlined_call_operand.hbm [shape: f32[6,16,16], index: 3, kind: input, shape index: {}]
  %s4 = inlined_call_operand.vmem [shape: f32[6,1,2,16], index: 4, kind: input, shape index: {}, may-alias: {1,2,4,5}]
  %s5 = inlined_call_operand.vmem [shape: f32[6,1,2,16], index: 5, kind: input, shape index: {}, may-alias: {1,2,4,5}]
  %s6 = inlined_call_operand.vmem [shape: f32[6,16,16], index: 6, kind: output, shape index: {0}]
  %s7 = inlined_call_operand.vmem [shape: f32[6,16,16], index: 7, kind: output, shape index: {1}]
  %8 = xla_tuple %s6, %s7
  %s9 = sld [smem:[#allocation0]]
  $region73: #{get_mask.3} parent=0
    _
  %s11 = ssub.s32 1, %s9
  %s12 = scalar_select 0, %s11, %s9
  $region1: #{get_mask.3} parent=0
    #allocation4 [shape = 'u8[16384]{0}', space=vmem, size = 0x4000, scoped, tag = 'input window, operand 0']
    #allocation5 [shape = 's32[2]{0}', space=sflag, size = 0x8, scoped, tag = 'scoped memory for get_mask.3']
    #allocation6 [shape = 'u8[16384]{0}', space=vmem, size = 0x4000, scoped, tag = 'input window, operand 3']
    #allocation7 [shape = 's32[2]{0}', space=sflag, size = 0x8, scoped, tag = 'scoped memory for get_mask.3']
    %13 = vsyncpa [#allocation5], 0
    %s14 = scalar_lea.sflag [#allocation5], 1
    %15 = vsyncpa %s14, 0
    %16 = vsyncpa [#allocation7], 0
    %s17 = scalar_lea.sflag [#allocation7], 1
    %18 = vsyncpa %s17, 0
    loop: start=0, step=1, limit=8
    $region2: #{get_mask.3} parent=1 // loop_pre_header
      _
    $region3: #{get_mask.3} parent=1 // loop_header
      %s20 = sphi 0, %s24
      %p21 = scmp.ge.s32.totalorder %s20, 8
      %s27 = sphi 0, %s39
      %s28 = sphi 0, %s35
      %s29 = sphi 0, %s27
      %s30 = sphi 0, %s28
      %s31 = sphi 0, %s29
      %s32 = sphi 0, %s30
      %s44 = sphi 0, %s46
      %s47 = sphi 0, %s44
      %s48 = sphi 0, %s47
      %s64 = sphi 0, %s48
      %s72 = sphi 0, %s74
      %s75 = sphi 0, %s72
      %s76 = sphi 0, %s75
      %s92 = sphi 0, %s76
      %s100 = sphi 0, %s102
      %s103 = sphi 0, %s100
      %s104 = sphi 0, %s103
      %s120 = sphi 0, %s104
      %s128 = sphi 0, %s130
      %s131 = sphi 0, %s128
      %s132 = sphi 0, %s131
      %s148 = sphi 0, %s132
      %s156 = sphi 0, %s158
      %s159 = sphi 0, %s156
      %s160 = sphi 0, %s159
      %s176 = sphi 0, %s160
      %s184 = sphi 0, %s186
      %s187 = sphi 0, %s184
      %s188 = sphi 0, %s187
      %s204 = sphi 0, %s188
      %s212 = sphi 0, %s214
      %s215 = sphi 0, %s212
      %s216 = sphi 0, %s215
      %s232 = sphi 0, %s216
      %s240 = sphi 0, %s242
      %s243 = sphi 0, %s240
      %s244 = sphi 0, %s243
      %s260 = sphi 0, %s244
    $region4: #{get_mask.3} parent=1 // loop_header_branch
      %23 = sbr.rel (%p21) target = $region8
    $region5: #{get_mask.3} parent=1 // loop_body
      %s25 = ssub.s32 %s20, 1
      %s26 = ssub.s32 %s20, 2
      %s33 = sadd.s32 1, %s28
      %p34 = scmp.ge.s32.totalorder %s33, 1
      %s35 = scalar_select %p34, 0, %s33
      %s36 = sadd.s32 1, %s27
      %s37 = scalar_select %p34, %s36, %s27
      %p38 = scmp.ge.s32.totalorder %s37, 6
      %s39 = scalar_select %p38, 0, %s37
      %s40 = ssub.s32 %s27, %s39
      %s41 = ssub.s32 %s28, %s35
      %s42 = sor.u32 %s40, %s41
      %p43 = scmp.eq.s32.totalorder %s42, 0
      %s45 = sadd.s32 %s44, 1
      %s46 = scalar_select %p43, %s44, %s45
      %p49 = pneg %p43
      %p50 = scmp.eq.s32.totalorder %s20, 5
      %p51 = por %p49, %p50
      %p52 = scmp.ne.s32.totalorder %s44, %s47
      %p53 = scmp.eq.s32.totalorder %s20, 0
      %p54 = por %p52, %p53
      %p55 = scmp.ne.s32.totalorder %s44, %s47
      %p56 = scmp.eq.s32.totalorder %s25, 5
      %p57 = por %p55, %p56
      %p58 = scmp.ne.s32.totalorder %s47, %s48
      %p59 = scmp.eq.s32.totalorder %s25, 0
      %p60 = por %p58, %p59
      %p61 = scmp.ne.s32.totalorder %s47, %s48
      %p62 = scmp.eq.s32.totalorder %s26, 5
      %p63 = por %p61, %p62
      %p65 = scmp.ne.s32.totalorder %s48, %s64
      %p66 = scmp.eq.s32.totalorder %s26, 0
      %p67 = por %p65, %p66
      %s68 = ssub.s32 %s27, %s39
      %s69 = ssub.s32 %s28, %s35
      %s70 = sor.u32 %s68, %s69
      %p71 = scmp.eq.s32.totalorder %s70, 0
      %s73 = sadd.s32 %s72, 1
      %s74 = scalar_select %p71, %s72, %s73
      %p77 = pneg %p71
      %p78 = scmp.eq.s32.totalorder %s20, 5
      %p79 = por %p77, %p78
      %p80 = scmp.ne.s32.totalorder %s72, %s75
      %p81 = scmp.eq.s32.totalorder %s20, 0
      %p82 = por %p80, %p81
      %p83 = scmp.ne.s32.totalorder %s72, %s75
      %p84 = scmp.eq.s32.totalorder %s25, 5
      %p85 = por %p83, %p84
      %p86 = scmp.ne.s32.totalorder %s75, %s76
      %p87 = scmp.eq.s32.totalorder %s25, 0
      %p88 = por %p86, %p87
      %p89 = scmp.ne.s32.totalorder %s75, %s76
      %p90 = scmp.eq.s32.totalorder %s26, 5
      %p91 = por %p89, %p90
      %p93 = scmp.ne.s32.totalorder %s76, %s92
      %p94 = scmp.eq.s32.totalorder %s26, 0
      %p95 = por %p93, %p94
      %s96 = ssub.s32 %s27, %s39
      %s97 = ssub.s32 %s28, %s35
      %s98 = sor.u32 %s96, %s97
      %p99 = scmp.eq.s32.totalorder %s98, 0
      %s101 = sadd.s32 %s100, 1
      %s102 = scalar_select %p99, %s100, %s101
      %p105 = pneg %p99
      %p106 = scmp.eq.s32.totalorder %s20, 5
      %p107 = por %p105, %p106
      %p108 = scmp.ne.s32.totalorder %s100, %s103
      %p109 = scmp.eq.s32.totalorder %s20, 0
      %p110 = por %p108, %p109
      %p111 = scmp.ne.s32.totalorder %s100, %s103
      %p112 = scmp.eq.s32.totalorder %s25, 5
      %p113 = por %p111, %p112
      %p114 = scmp.ne.s32.totalorder %s103, %s104
      %p115 = scmp.eq.s32.totalorder %s25, 0
      %p116 = por %p114, %p115
      %p117 = scmp.ne.s32.totalorder %s103, %s104
      %p118 = scmp.eq.s32.totalorder %s26, 5
      %p119 = por %p117, %p118
      %p121 = scmp.ne.s32.totalorder %s104, %s120
      %p122 = scmp.eq.s32.totalorder %s26, 0
      %p123 = por %p121, %p122
      %s124 = ssub.s32 %s27, %s39
      %s125 = ssub.s32 %s28, %s35
      %s126 = sor.u32 %s124, %s125
      %p127 = scmp.eq.s32.totalorder %s126, 0
      %s129 = sadd.s32 %s128, 1
      %s130 = scalar_select %p127, %s128, %s129
      %p133 = pneg %p127
      %p134 = scmp.eq.s32.totalorder %s20, 5
      %p135 = por %p133, %p134
      %p136 = scmp.ne.s32.totalorder %s128, %s131
      %p137 = scmp.eq.s32.totalorder %s20, 0
      %p138 = por %p136, %p137
      %p139 = scmp.ne.s32.totalorder %s128, %s131
      %p140 = scmp.eq.s32.totalorder %s25, 5
      %p141 = por %p139, %p140
      %p142 = scmp.ne.s32.totalorder %s131, %s132
      %p143 = scmp.eq.s32.totalorder %s25, 0
      %p144 = por %p142, %p143
      %p145 = scmp.ne.s32.totalorder %s131, %s132
      %p146 = scmp.eq.s32.totalorder %s26, 5
      %p147 = por %p145, %p146
      %p149 = scmp.ne.s32.totalorder %s132, %s148
      %p150 = scmp.eq.s32.totalorder %s26, 0
      %p151 = por %p149, %p150
      %s152 = ssub.s32 %s27, %s39
      %s153 = ssub.s32 %s28, %s35
      %s154 = sor.u32 %s152, %s153
      %p155 = scmp.eq.s32.totalorder %s154, 0
      %s157 = sadd.s32 %s156, 1
      %s158 = scalar_select %p155, %s156, %s157
      %p161 = pneg %p155
      %p162 = scmp.eq.s32.totalorder %s20, 5
      %p163 = por %p161, %p162
      %p164 = scmp.ne.s32.totalorder %s156, %s159
      %p165 = scmp.eq.s32.totalorder %s20, 0
      %p166 = por %p164, %p165
      %p167 = scmp.ne.s32.totalorder %s156, %s159
      %p168 = scmp.eq.s32.totalorder %s25, 5
      %p169 = por %p167, %p168
      %p170 = scmp.ne.s32.totalorder %s159, %s160
      %p171 = scmp.eq.s32.totalorder %s25, 0
      %p172 = por %p170, %p171
      %p173 = scmp.ne.s32.totalorder %s159, %s160
      %p174 = scmp.eq.s32.totalorder %s26, 5
      %p175 = por %p173, %p174
      %p177 = scmp.ne.s32.totalorder %s160, %s176
      %p178 = scmp.eq.s32.totalorder %s26, 0
      %p179 = por %p177, %p178
      %s180 = ssub.s32 %s27, %s39
      %s181 = ssub.s32 %s28, %s35
      %s182 = sor.u32 %s180, %s181
      %p183 = scmp.eq.s32.totalorder %s182, 0
      %s185 = sadd.s32 %s184, 1
      %s186 = scalar_select %p183, %s184, %s185
      %p189 = pneg %p183
      %p190 = scmp.eq.s32.totalorder %s20, 5
      %p191 = por %p189, %p190
      %p192 = scmp.ne.s32.totalorder %s184, %s187
      %p193 = scmp.eq.s32.totalorder %s20, 0
      %p194 = por %p192, %p193
      %p195 = scmp.ne.s32.totalorder %s184, %s187
      %p196 = scmp.eq.s32.totalorder %s25, 5
      %p197 = por %p195, %p196
      %p198 = scmp.ne.s32.totalorder %s187, %s188
      %p199 = scmp.eq.s32.totalorder %s25, 0
      %p200 = por %p198, %p199
      %p201 = scmp.ne.s32.totalorder %s187, %s188
      %p202 = scmp.eq.s32.totalorder %s26, 5
      %p203 = por %p201, %p202
      %p205 = scmp.ne.s32.totalorder %s188, %s204
      %p206 = scmp.eq.s32.totalorder %s26, 0
      %p207 = por %p205, %p206
      %s208 = ssub.s32 %s27, %s39
      %s209 = ssub.s32 %s28, %s35
      %s210 = sor.u32 %s208, %s209
      %p211 = scmp.eq.s32.totalorder %s210, 0
      %s213 = sadd.s32 %s212, 1
      %s214 = scalar_select %p211, %s212, %s213
      %p217 = pneg %p211
      %p218 = scmp.eq.s32.totalorder %s20, 5
      %p219 = por %p217, %p218
      %p220 = scmp.ne.s32.totalorder %s212, %s215
      %p221 = scmp.eq.s32.totalorder %s20, 0
      %p222 = por %p220, %p221
      %p223 = scmp.ne.s32.totalorder %s212, %s215
      %p224 = scmp.eq.s32.totalorder %s25, 5
      %p225 = por %p223, %p224
      %p226 = scmp.ne.s32.totalorder %s215, %s216
      %p227 = scmp.eq.s32.totalorder %s25, 0
      %p228 = por %p226, %p227
      %p229 = scmp.ne.s32.totalorder %s215, %s216
      %p230 = scmp.eq.s32.totalorder %s26, 5
      %p231 = por %p229, %p230
      %p233 = scmp.ne.s32.totalorder %s216, %s232
      %p234 = scmp.eq.s32.totalorder %s26, 0
      %p235 = por %p233, %p234
      %s236 = ssub.s32 %s27, %s39
      %s237 = ssub.s32 %s28, %s35
      %s238 = sor.u32 %s236, %s237
      %p239 = scmp.eq.s32.totalorder %s238, 0
      %s241 = sadd.s32 %s240, 1
      %s242 = scalar_select %p239, %s240, %s241
      %p245 = pneg %p239
      %p246 = scmp.eq.s32.totalorder %s20, 5
      %p247 = por %p245, %p246
      %p248 = scmp.ne.s32.totalorder %s240, %s243
      %p249 = scmp.eq.s32.totalorder %s20, 0
      %p250 = por %p248, %p249
      %p251 = scmp.ne.s32.totalorder %s240, %s243
      %p252 = scmp.eq.s32.totalorder %s25, 5
      %p253 = por %p251, %p252
      %p254 = scmp.ne.s32.totalorder %s243, %s244
      %p255 = scmp.eq.s32.totalorder %s25, 0
      %p256 = por %p254, %p255
      %p257 = scmp.ne.s32.totalorder %s243, %s244
      %p258 = scmp.eq.s32.totalorder %s26, 5
      %p259 = por %p257, %p258
      %p261 = scmp.ne.s32.totalorder %s244, %s260
      %p262 = scmp.eq.s32.totalorder %s26, 0
      %p263 = por %p261, %p262
      %p264 = scmp.le.s32.totalorder 1, %s20
      %p265 = scmp.lt.s32.totalorder %s20, 7
      %p266 = pnand %p264, %p265
      %p267 = pneg %p266
      // Predicated region
      $region9: #{get_mask.3} parent=5 // pred_check
        _
      $region10: #{get_mask.3} parent=5 // pred_check_branch
        %269 = sbr.rel (%p266) target = $region12
      $region11: #{get_mask.3} parent=5 // pred_region
        %s270 = ssub.s32 %s20, 1
      $region12: #{get_mask.3} parent=5 // pred_fallthru
        _
      %p271 = scmp.lt.s32.totalorder %s20, 6
      // Predicated region
      $region13: #{get_mask.3} parent=5 // pred_check
        %p272 = pneg %p271
      $region14: #{get_mask.3} parent=5 // pred_check_branch
        %274 = sbr.rel (%p272) target = $region16
      $region15: #{get_mask.3} parent=5 // pred_region
        // Predicated region
        $region17: #{get_mask.3} parent=15 // pred_check
          %p275 = pneg %p54
        $region18: #{get_mask.3} parent=15 // pred_check_branch
          %277 = sbr.rel (%p275) target = $region20
        $region19: #{get_mask.3} parent=15 // pred_region
          %s278 = sand.u32 %s44, 1
          %s279 = scalar_lea.sflag [#allocation5], %s278
          %s280 = sand.u32 %s44, 1
          %s281 = smul.addr %s280, 16
          %s282 = scalar_lea.vmem [#allocation4], %s281
          %s283 = smul.u32 2, %s28
          %s285 = ssub.s32 256, 256
          %286 = vsyncadd %s279, %s285
          %s287 = smul.addr %s27, 2
          %s288 = sadd.s32 %s283, %s287
          %s289 = smul.addr %s288, 128
          %s290 = scalar_lea.hbm %s0, %s289
          %s291 = sshll.u32 %s282, 4
          %s292 = int_to_ptr.vmem [resolvable:$true] %s291
          %297 = dma.hbm_to_vmem [thread:$0]  %s290, 256, %s292, %s279, 128, 128, 8
        $region20: #{get_mask.3} parent=15 // pred_fallthru
          _
        // Predicated region
        $region21: #{get_mask.3} parent=15 // pred_check
          %p298 = pneg %p82
        $region22: #{get_mask.3} parent=15 // pred_check_branch
          %300 = sbr.rel (%p298) target = $region24
        $region23: #{get_mask.3} parent=15 // pred_region
          %p301 = scmp.lt.s32.totalorder %s27, 5
          %s302 = scalar_select %p301, %s27, 5
          %p303 = scmp.lt.s32.totalorder %s28, 0
          %s304 = scalar_select %p303, %s28, 0
          %s305 = sadd.s32 %s304, %s302
          %s306 = smul.addr %s305, 2
          %s307 = scalar_lea.vmem %s1, %s306
        $region24: #{get_mask.3} parent=15 // pred_fallthru
          _
        // Predicated region
        $region25: #{get_mask.3} parent=15 // pred_check
          %p308 = pneg %p110
        $region26: #{get_mask.3} parent=15 // pred_check_branch
          %310 = sbr.rel (%p308) target = $region28
        $region27: #{get_mask.3} parent=15 // pred_region
          %p311 = scmp.lt.s32.totalorder %s27, 5
          %s312 = scalar_select %p311, %s27, 5
          %p313 = scmp.lt.s32.totalorder %s28, 0
          %s314 = scalar_select %p313, %s28, 0
          %s315 = sadd.s32 %s314, %s312
          %s316 = smul.addr %s315, 2
          %s317 = scalar_lea.vmem %s2, %s316
        $region28: #{get_mask.3} parent=15 // pred_fallthru
          _
        // Predicated region
        $region29: #{get_mask.3} parent=15 // pred_check
          %p318 = pneg %p138
        $region30: #{get_mask.3} parent=15 // pred_check_branch
          %320 = sbr.rel (%p318) target = $region32
        $region31: #{get_mask.3} parent=15 // pred_region
          %s321 = sand.u32 %s128, 1
          %s322 = scalar_lea.sflag [#allocation7], %s321
          %s323 = sand.u32 %s128, 1
          %s324 = smul.addr %s323, 16
          %s325 = scalar_lea.vmem [#allocation6], %s324
          %s326 = smul.u32 2, %s28
          %s328 = ssub.s32 256, 256
          %329 = vsyncadd %s322, %s328
          %s330 = smul.addr %s27, 2
          %s331 = sadd.s32 %s326, %s330
          %s332 = smul.addr %s331, 128
          %s333 = scalar_lea.hbm %s3, %s332
          %s334 = sshll.u32 %s325, 4
          %s335 = int_to_ptr.vmem [resolvable:$true] %s334
          %340 = dma.hbm_to_vmem [thread:$0]  %s333, 256, %s335, %s322, 128, 128, 8
        $region32: #{get_mask.3} parent=15 // pred_fallthru
          _
        // Predicated region
        $region33: #{get_mask.3} parent=15 // pred_check
          %p341 = pneg %p166
        $region34: #{get_mask.3} parent=15 // pred_check_branch
          %343 = sbr.rel (%p341) target = $region36
        $region35: #{get_mask.3} parent=15 // pred_region
          %p344 = scmp.lt.s32.totalorder %s27, 5
          %s345 = scalar_select %p344, %s27, 5
          %p346 = scmp.lt.s32.totalorder %s28, 0
          %s347 = scalar_select %p346, %s28, 0
          %s348 = sadd.s32 %s347, %s345
          %s349 = smul.addr %s348, 2
          %s350 = scalar_lea.vmem %s4, %s349
        $region36: #{get_mask.3} parent=15 // pred_fallthru
          _
        // Predicated region
        $region37: #{get_mask.3} parent=15 // pred_check
          %p351 = pneg %p194
        $region38: #{get_mask.3} parent=15 // pred_check_branch
          %353 = sbr.rel (%p351) target = $region40
        $region39: #{get_mask.3} parent=15 // pred_region
          %p354 = scmp.lt.s32.totalorder %s27, 5
          %s355 = scalar_select %p354, %s27, 5
          %p356 = scmp.lt.s32.totalorder %s28, 0
          %s357 = scalar_select %p356, %s28, 0
          %s358 = sadd.s32 %s357, %s355
          %s359 = smul.addr %s358, 2
          %s360 = scalar_lea.vmem %s5, %s359
        $region40: #{get_mask.3} parent=15 // pred_fallthru
          _
      $region16: #{get_mask.3} parent=5 // pred_fallthru
        _
      %p361 = scmp.le.s32.totalorder 1, %s20
      %p362 = scmp.lt.s32.totalorder %s20, 7
      %p363 = pnand %p361, %p362
      %p364 = pneg %p363
      // Predicated region
      $region41: #{get_mask.3} parent=5 // pred_check
        _
      $region42: #{get_mask.3} parent=5 // pred_check_branch
        %366 = sbr.rel (%p363) target = $region44
      $region43: #{get_mask.3} parent=5 // pred_region
        %s367 = ssub.s32 %s20, 1
        %s368 = sand.u32 %s47, 1
        %s369 = scalar_lea.sflag [#allocation5], %s368
        %s370 = sand.u32 %s47, 1
        %s371 = smul.addr %s370, 16
        %s372 = scalar_lea.vmem [#allocation4], %s371
        // Predicated region
        $region45: #{get_mask.3} parent=43 // pred_check
          %p373 = pneg %p60
        $region46: #{get_mask.3} parent=43 // pred_check_branch
          %375 = sbr.rel (%p373) target = $region48
        $region47: #{get_mask.3} parent=43 // pred_region
          %376 = dma.done %s369, 256
        $region48: #{get_mask.3} parent=43 // pred_fallthru
          _
        %s377 = sand.u32 %s131, 1
        %s378 = scalar_lea.sflag [#allocation7], %s377
        %s379 = sand.u32 %s131, 1
        %s380 = smul.addr %s379, 16
        %s381 = scalar_lea.vmem [#allocation6], %s380
        // Predicated region
        $region49: #{get_mask.3} parent=43 // pred_check
          %p382 = pneg %p144
        $region50: #{get_mask.3} parent=43 // pred_check_branch
          %384 = sbr.rel (%p382) target = $region52
        $region51: #{get_mask.3} parent=43 // pred_region
          %385 = dma.done %s378, 256
        $region52: #{get_mask.3} parent=43 // pred_fallthru
          _
        %s386 = sand.u32 %s47, 1
        %s387 = scalar_lea.sflag [#allocation5], %s386
        %s388 = sand.u32 %s47, 1
        %s389 = smul.addr %s388, 16
        %s390 = scalar_lea.vmem [#allocation4], %s389
        %p391 = pneg %p60
        %p392 = pneg %p57
        %p393 = scmp.lt.s32.totalorder %s29, 5
        %s394 = scalar_select %p393, %s29, 5
        %p395 = scmp.lt.s32.totalorder %s30, 0
        %s396 = scalar_select %p395, %s30, 0
        %s397 = sadd.s32 %s396, %s394
        %s398 = smul.addr %s397, 2
        %s399 = scalar_lea.vmem %s1, %s398
        %p400 = pneg %p88
        %p401 = pneg %p85
        %p402 = scmp.lt.s32.totalorder %s29, 5
        %s403 = scalar_select %p402, %s29, 5
        %p404 = scmp.lt.s32.totalorder %s30, 0
        %s405 = scalar_select %p404, %s30, 0
        %s406 = sadd.s32 %s405, %s403
        %s407 = smul.addr %s406, 2
        %s408 = scalar_lea.vmem %s2, %s407
        %p409 = pneg %p116
        %p410 = pneg %p113
        %s411 = sand.u32 %s131, 1
        %s412 = scalar_lea.sflag [#allocation7], %s411
        %s413 = sand.u32 %s131, 1
        %s414 = smul.addr %s413, 16
        %s415 = scalar_lea.vmem [#allocation6], %s414
        %p416 = pneg %p144
        %p417 = pneg %p141
        %p418 = scmp.lt.s32.totalorder %s29, 5
        %s419 = scalar_select %p418, %s29, 5
        %p420 = scmp.lt.s32.totalorder %s30, 0
        %s421 = scalar_select %p420, %s30, 0
        %s422 = sadd.s32 %s421, %s419
        %s423 = smul.addr %s422, 2
        %s424 = scalar_lea.vmem %s4, %s423
        %p425 = pneg %p172
        %p426 = pneg %p169
        %p427 = scmp.lt.s32.totalorder %s29, 5
        %s428 = scalar_select %p427, %s29, 5
        %p429 = scmp.lt.s32.totalorder %s30, 0
        %s430 = scalar_select %p429, %s30, 0
        %s431 = sadd.s32 %s430, %s428
        %s432 = smul.addr %s431, 2
        %s433 = scalar_lea.vmem %s5, %s432
        %p434 = pneg %p200
        %p435 = pneg %p197
        %p436 = pneg %p228
        %p437 = pneg %p225
        %s438 = smul.u32 2, %s30
        %p439 = scmp.lt.s32.totalorder %s29, 5
        %s440 = scalar_select %p439, %s29, 5
        %p441 = scmp.lt.s32.totalorder %s438, 1
        %s442 = scalar_select %p441, %s438, 1
        %s443 = smul.addr %s440, 2
        %s444 = sadd.s32 %s442, %s443
        %s445 = smul.addr %s444, 8
        %s446 = scalar_lea.vmem %s6, %s445
        %p447 = pneg %p256
        %p448 = pneg %p253
        %s449 = smul.u32 2, %s30
        %p450 = scmp.lt.s32.totalorder %s29, 5
        %s451 = scalar_select %p450, %s29, 5
        %p452 = scmp.lt.s32.totalorder %s449, 1
        %s453 = scalar_select %p452, %s449, 1
        %s454 = smul.addr %s451, 2
        %s455 = sadd.s32 %s453, %s454
        %s456 = smul.addr %s455, 8
        %s457 = scalar_lea.vmem %s7, %s456
        %s458 = smul.u32 2, %s30
        %p459 = scmp.lt.s32.totalorder %s29, 5
        %s460 = scalar_select %p459, %s29, 5
        %p461 = scmp.lt.s32.totalorder %s30, 0
        %s462 = scalar_select %p461, %s30, 0
        %s463 = sadd.s32 %s462, %s460
        %s464 = smul.addr %s463, 2
        %s465 = scalar_lea.vmem %s1, %s464
        %p466 = scmp.lt.s32.totalorder %s29, 5
        %s467 = scalar_select %p466, %s29, 5
        %p468 = scmp.lt.s32.totalorder %s30, 0
        %s469 = scalar_select %p468, %s30, 0
        %s470 = sadd.s32 %s469, %s467
        %s471 = smul.addr %s470, 2
        %s472 = scalar_lea.vmem %s2, %s471
        %s473 = smul.u32 2, %s30
        %p474 = scmp.lt.s32.totalorder %s29, 5
        %s475 = scalar_select %p474, %s29, 5
        %p476 = scmp.lt.s32.totalorder %s30, 0
        %s477 = scalar_select %p476, %s30, 0
        %s478 = sadd.s32 %s477, %s475
        %s479 = smul.addr %s478, 2
        %s480 = scalar_lea.vmem %s4, %s479
        %p481 = scmp.lt.s32.totalorder %s29, 5
        %s482 = scalar_select %p481, %s29, 5
        %p483 = scmp.lt.s32.totalorder %s30, 0
        %s484 = scalar_select %p483, %s30, 0
        %s485 = sadd.s32 %s484, %s482
        %s486 = smul.addr %s485, 2
        %s487 = scalar_lea.vmem %s5, %s486
        %s488 = smul.u32 2, %s30
        %p489 = scmp.lt.s32.totalorder %s29, 5
        %s490 = scalar_select %p489, %s29, 5
        %p491 = scmp.lt.s32.totalorder %s488, 1
        %s492 = scalar_select %p491, %s488, 1
        %s493 = smul.addr %s490, 2
        %s494 = sadd.s32 %s492, %s493
        %s495 = smul.addr %s494, 8
        %s496 = scalar_lea.vmem %s6, %s495
        %s497 = smul.u32 2, %s30
        %s498 = smul.u32 2, %s30
        %p499 = scmp.lt.s32.totalorder %s29, 5
        %s500 = scalar_select %p499, %s29, 5
        %p501 = scmp.lt.s32.totalorder %s498, 1
        %s502 = scalar_select %p501, %s498, 1
        %s503 = smul.addr %s500, 2
        %s504 = sadd.s32 %s502, %s503
        %s505 = smul.addr %s504, 8
        %s506 = scalar_lea.vmem %s7, %s505
        %s507 = smul.u32 2, %s30
        %vm508 = vcmask 162816
        %509 = vst.msk [vmem:[#allocation2] sm:$0xff] %vm508, 0.0
        %510 = vst.msk [vmem:[#allocation2 + $0x8] sm:$0xff] %vm508, 0.0
        %vm511 = vcmask 158720
        %512 = vst.msk [vmem:[#allocation2 + $0x10] sm:$0xf] %vm511, 0.0
        %v513 = vld [vmem:[%s465] sm:$0x3]
        %515 = vrot.lane.b32.xlu0 %v513, 2
        %v516 = vpop.permute.xlu0 %515
        %vm518 = vcmask 140304
        %519 = vst.msk [vmem:[#allocation2] sm:$0x3] %vm518, %v516
        %v520 = vld [vmem:[%s372] sm:$0xff]
        %v521 = vld [vmem:[%s372 + $0x8] sm:$0xff]
        %524 = vrot.lane.b32.xlu0 %v520, 2
        %v525 = vpop.permute.xlu0 %524
        %526 = vrot.lane.b32.xlu0 %v521, 2
        %v527 = vpop.permute.xlu0 %526
        %vm530 = vcmask 146448
        %531 = vst.msk [vmem:[#allocation2 + $0x2] sm:$0xff] %vm530, %v525
        %532 = vst.msk [vmem:[#allocation2 + $0xa] sm:$0xff] %vm530, %v527
        %v533 = vld [vmem:[%s472] sm:$0x3]
        %535 = vrot.lane.b32.xlu0 %v533, 2
        %v536 = vpop.permute.xlu0 %535
        %538 = vst.msk [vmem:[#allocation2 + $0x12] sm:$0x3] %vm518, %v536
        %v539 = vld [vmem:[#allocation2] sm:$0xff]
        %v540 = vld [vmem:[#allocation2 + $0x8] sm:$0xff]
        %v541 = vld [vmem:[#allocation2 + $0x1] sm:$0xff]
        %v542 = vld [vmem:[#allocation2 + $0x9] sm:$0xff]
        %v543 = vld [vmem:[#allocation2 + $0x2] sm:$0xff]
        %v544 = vld [vmem:[#allocation2 + $0xa] sm:$0xff]
        %v545 = vld [vmem:[#allocation2 + $0x3] sm:$0xff]
        %v546 = vld [vmem:[#allocation2 + $0xb] sm:$0xff]
        %v547 = vld [vmem:[#allocation2 + $0x4] sm:$0xff]
        %v548 = vld [vmem:[#allocation2 + $0xc] sm:$0xff]
        %v549 = vadd.f32 %v539, %v541
        %v550 = vadd.f32 %v540, %v542
        %v551 = vadd.f32 %v543, %v545
        %v552 = vadd.f32 %v544, %v546
        %v553 = vadd.f32 %v549, %v551
        %v554 = vadd.f32 %v550, %v552
        %v555 = vadd.f32 %v553, %v547
        %v556 = vadd.f32 %v554, %v548
        %557 = vst.msk [vmem:[#allocation3] sm:$0xff] %vm508, %v555
        %558 = vst.msk [vmem:[#allocation3 + $0x8] sm:$0xff] %vm508, %v556
        %v559 = vld [vmem:[#allocation3] sm:$0xff]
        %v560 = vld [vmem:[#allocation3 + $0x8] sm:$0xff]
        %563 = vrot.lane.b32.xlu0 %v559, 127
        %v564 = vpop.permute.xlu0 %563
        %565 = vrot.lane.b32.xlu0 %v560, 127
        %v566 = vpop.permute.xlu0 %565
        %v569 = vadd.f32 %v559, %v564
        %v570 = vadd.f32 %v560, %v566
        %573 = vrot.lane.b32.xlu0 %v569, 126
        %v574 = vpop.permute.xlu0 %573
        %575 = vrot.lane.b32.xlu0 %v570, 126
        %v576 = vpop.permute.xlu0 %575
        %v579 = vadd.f32 %v569, %v574
        %v580 = vadd.f32 %v570, %v576
        %581 = vrot.lane.b32.xlu0 %v559, 124
        %v582 = vpop.permute.xlu0 %581
        %583 = vrot.lane.b32.xlu0 %v560, 124
        %v584 = vpop.permute.xlu0 %583
        %v587 = vadd.f32 %v579, %v582
        %v588 = vadd.f32 %v580, %v584
        %v589 = vmul.f32 %v587, 0.04
        %v590 = vmul.f32 %v588, 0.04
        %vm591 = vcmask 130048
        %592 = vst.msk [vmem:[%s496] sm:$0xff] %vm591, %v589
        %593 = vst.msk [vmem:[%s496 + $0x8] sm:$0xff] %vm591, %v590
        %594 = vst.msk [vmem:[#allocation2] sm:$0xff] %vm508, 0.0
        %595 = vst.msk [vmem:[#allocation2 + $0x8] sm:$0xff] %vm508, 0.0
        %596 = vst.msk [vmem:[#allocation2 + $0x10] sm:$0xf] %vm511, 0.0
        %v597 = vld [vmem:[%s480] sm:$0x3]
        %599 = vrot.lane.b32.xlu0 %v597, 2
        %v600 = vpop.permute.xlu0 %599
        %602 = vst.msk [vmem:[#allocation2] sm:$0x3] %vm518, %v600
        %v603 = vld [vmem:[%s381] sm:$0xff]
        %v604 = vld [vmem:[%s381 + $0x8] sm:$0xff]
        %607 = vrot.lane.b32.xlu0 %v603, 2
        %v608 = vpop.permute.xlu0 %607
        %609 = vrot.lane.b32.xlu0 %v604, 2
        %v610 = vpop.permute.xlu0 %609
        %613 = vst.msk [vmem:[#allocation2 + $0x2] sm:$0xff] %vm530, %v608
        %614 = vst.msk [vmem:[#allocation2 + $0xa] sm:$0xff] %vm530, %v610
        %v615 = vld [vmem:[%s487] sm:$0x3]
        %617 = vrot.lane.b32.xlu0 %v615, 2
        %v618 = vpop.permute.xlu0 %617
        %620 = vst.msk [vmem:[#allocation2 + $0x12] sm:$0x3] %vm518, %v618
        %v621 = vld [vmem:[#allocation2] sm:$0xff]
        %v622 = vld [vmem:[#allocation2 + $0x8] sm:$0xff]
        %v623 = vld [vmem:[#allocation2 + $0x1] sm:$0xff]
        %v624 = vld [vmem:[#allocation2 + $0x9] sm:$0xff]
        %v625 = vld [vmem:[#allocation2 + $0x2] sm:$0xff]
        %v626 = vld [vmem:[#allocation2 + $0xa] sm:$0xff]
        %v627 = vld [vmem:[#allocation2 + $0x3] sm:$0xff]
        %v628 = vld [vmem:[#allocation2 + $0xb] sm:$0xff]
        %v629 = vld [vmem:[#allocation2 + $0x4] sm:$0xff]
        %v630 = vld [vmem:[#allocation2 + $0xc] sm:$0xff]
        %v631 = vadd.f32 %v621, %v623
        %v632 = vadd.f32 %v622, %v624
        %v633 = vadd.f32 %v625, %v627
        %v634 = vadd.f32 %v626, %v628
        %v635 = vadd.f32 %v631, %v633
        %v636 = vadd.f32 %v632, %v634
        %v637 = vadd.f32 %v635, %v629
        %v638 = vadd.f32 %v636, %v630
        %639 = vst.msk [vmem:[#allocation3] sm:$0xff] %vm508, %v637
        %640 = vst.msk [vmem:[#allocation3 + $0x8] sm:$0xff] %vm508, %v638
        %v641 = vld [vmem:[#allocation3] sm:$0xff]
        %v642 = vld [vmem:[#allocation3 + $0x8] sm:$0xff]
        %645 = vrot.lane.b32.xlu0 %v641, 127
        %v646 = vpop.permute.xlu0 %645
        %647 = vrot.lane.b32.xlu0 %v642, 127
        %v648 = vpop.permute.xlu0 %647
        %v651 = vadd.f32 %v641, %v646
        %v652 = vadd.f32 %v642, %v648
        %655 = vrot.lane.b32.xlu0 %v651, 126
        %v656 = vpop.permute.xlu0 %655
        %657 = vrot.lane.b32.xlu0 %v652, 126
        %v658 = vpop.permute.xlu0 %657
        %v661 = vadd.f32 %v651, %v656
        %v662 = vadd.f32 %v652, %v658
        %663 = vrot.lane.b32.xlu0 %v641, 124
        %v664 = vpop.permute.xlu0 %663
        %665 = vrot.lane.b32.xlu0 %v642, 124
        %v666 = vpop.permute.xlu0 %665
        %v669 = vadd.f32 %v661, %v664
        %v670 = vadd.f32 %v662, %v666
        %v671 = vmul.f32 %v669, 0.04
        %v672 = vmul.f32 %v670, 0.04
        %673 = vst.msk [vmem:[%s506] sm:$0xff] %vm591, %v671
        %674 = vst.msk [vmem:[%s506 + $0x8] sm:$0xff] %vm591, %v672
        %s675 = smul.u32 2, %s30
        %p676 = scmp.lt.s32.totalorder %s29, 5
        %s677 = scalar_select %p676, %s29, 5
        %p678 = scmp.lt.s32.totalorder %s675, 1
        %s679 = scalar_select %p678, %s675, 1
        %s680 = smul.addr %s677, 2
        %s681 = sadd.s32 %s679, %s680
        %s682 = smul.addr %s681, 8
        %s683 = scalar_lea.vmem %s6, %s682
        %s684 = smul.u32 2, %s30
        %p685 = scmp.lt.s32.totalorder %s29, 5
        %s686 = scalar_select %p685, %s29, 5
        %p687 = scmp.lt.s32.totalorder %s684, 1
        %s688 = scalar_select %p687, %s684, 1
        %s689 = smul.addr %s686, 2
        %s690 = sadd.s32 %s688, %s689
        %s691 = smul.addr %s690, 8
        %s692 = scalar_lea.vmem %s7, %s691
        // Predicated region
        $region53: #{get_mask.3} parent=43 // pred_check
          %p693 = pneg %p225
        $region54: #{get_mask.3} parent=43 // pred_check_branch
          %695 = sbr.rel (%p693) target = $region56
        $region55: #{get_mask.3} parent=43 // pred_region
          %s696 = smul.u32 2, %s30
        $region56: #{get_mask.3} parent=43 // pred_fallthru
          _
        // Predicated region
        $region57: #{get_mask.3} parent=43 // pred_check
          %p697 = pneg %p253
        $region58: #{get_mask.3} parent=43 // pred_check_branch
          %699 = sbr.rel (%p697) target = $region60
        $region59: #{get_mask.3} parent=43 // pred_region
          %s700 = smul.u32 2, %s30
        $region60: #{get_mask.3} parent=43 // pred_fallthru
          _
      $region44: #{get_mask.3} parent=5 // pred_fallthru
        _
      %p701 = scmp.le.s32.totalorder 2, %s20
      // Predicated region
      $region61: #{get_mask.3} parent=5 // pred_check
        %p702 = pneg %p701
      $region62: #{get_mask.3} parent=5 // pred_check_branch
        %704 = sbr.rel (%p702) target = $region64
      $region63: #{get_mask.3} parent=5 // pred_region
        %s705 = ssub.s32 %s20, 2
        // Predicated region
        $region65: #{get_mask.3} parent=63 // pred_check
          %p706 = pneg %p231
        $region66: #{get_mask.3} parent=63 // pred_check_branch
          %708 = sbr.rel (%p706) target = $region68
        $region67: #{get_mask.3} parent=63 // pred_region
          %s709 = smul.u32 2, %s32
          %p710 = scmp.lt.s32.totalorder %s31, 5
          %s711 = scalar_select %p710, %s31, 5
          %p712 = scmp.lt.s32.totalorder %s709, 1
          %s713 = scalar_select %p712, %s709, 1
          %s714 = smul.addr %s711, 2
          %s715 = sadd.s32 %s713, %s714
          %s716 = smul.addr %s715, 8
          %s717 = scalar_lea.vmem %s6, %s716
        $region68: #{get_mask.3} parent=63 // pred_fallthru
          _
        // Predicated region
        $region69: #{get_mask.3} parent=63 // pred_check
          %p718 = pneg %p259
        $region70: #{get_mask.3} parent=63 // pred_check_branch
          %720 = sbr.rel (%p718) target = $region72
        $region71: #{get_mask.3} parent=63 // pred_region
          %s721 = smul.u32 2, %s32
          %p722 = scmp.lt.s32.totalorder %s31, 5
          %s723 = scalar_select %p722, %s31, 5
          %p724 = scmp.lt.s32.totalorder %s721, 1
          %s725 = scalar_select %p724, %s721, 1
          %s726 = smul.addr %s723, 2
          %s727 = sadd.s32 %s725, %s726
          %s728 = smul.addr %s727, 8
          %s729 = scalar_lea.vmem %s7, %s728
        $region72: #{get_mask.3} parent=63 // pred_fallthru
          _
      $region64: #{get_mask.3} parent=5 // pred_fallthru
        _
    $region6: #{get_mask.3} parent=1 // loop_footer
      %s24 = sadd.s32 1, %s20
    $region7: #{get_mask.3} parent=1 // loop_footer_branch
      %19 = sbr.rel target = $region3
    $region8: #{get_mask.3} parent=1 // loop_exit
      _
    %730 = vsyncpa [#allocation5], 1
    %s731 = scalar_lea.sflag [#allocation5], 1
    %732 = vsyncpa %s731, 1
    %733 = vsyncpa [#allocation7], 1
    %s734 = scalar_lea.sflag [#allocation7], 1
    %735 = vsyncpa %s734, 1

// kernel: get_mask.4
$region0: #{get_mask.4}
  #allocation0 [shape = 'u32[]', space=smem, size = 0x4, offset = 0x4, fixed_abs, tag = 'smem constant byte address 0x4 - core index']
  #allocation1 [shape = 'u32[144,128]{1,0:T(1,128)}', space=vmem, size = 0x12000, scoped, tag = 'internal scratch']
  %s0 = inlined_call_operand.vmem [shape: f32[4], index: 0, kind: input, shape index: {}]
  %s1 = inlined_call_operand.vmem [shape: f32[2,3,16,16], index: 1, kind: input, shape index: {}]
  %s2 = inlined_call_operand.vmem [shape: f32[2,3,16,16], index: 2, kind: input, shape index: {}]
  %s3 = inlined_call_operand.vmem [shape: f32[2,16,16], index: 3, kind: output, shape index: {}]
  %s4 = sld [smem:[#allocation0]]
  $region49: #{get_mask.4} parent=0
    _
  %s6 = ssub.s32 1, %s4
  %s7 = scalar_select 0, %s6, %s4
  $region1: #{get_mask.4} parent=0
    #allocation2 [shape = 'u8[512]{0}', space=smem, size = 0x200, scoped, tag = 'input window, operand 0, single buffered']
    #allocation3 [shape = 's32[2]{0}', space=sflag, size = 0x8, scoped, tag = 'scoped memory for get_mask.4']
    %8 = vsyncpa [#allocation3], 0
    loop: start=0, step=1, limit=4
    $region2: #{get_mask.4} parent=1 // loop_pre_header
      _
    $region3: #{get_mask.4} parent=1 // loop_header
      %s10 = sphi 0, %s14
      %p11 = scmp.ge.s32.totalorder %s10, 4
      %s17 = sphi 0, %s29
      %s18 = sphi 0, %s25
      %s19 = sphi 0, %s17
      %s20 = sphi 0, %s18
      %s21 = sphi 0, %s19
      %s22 = sphi 0, %s20
      %s30 = sphi 0, %s30
      %s32 = sphi 0, %s30
      %s33 = sphi 0, %s32
      %s47 = sphi 0, %s33
      %s55 = sphi 0, %s57
      %s58 = sphi 0, %s55
      %s59 = sphi 0, %s58
      %s75 = sphi 0, %s59
      %s83 = sphi 0, %s85
      %s86 = sphi 0, %s83
      %s87 = sphi 0, %s86
      %s103 = sphi 0, %s87
      %s111 = sphi 0, %s113
      %s114 = sphi 0, %s111
      %s115 = sphi 0, %s114
      %s131 = sphi 0, %s115
    $region4: #{get_mask.4} parent=1 // loop_header_branch
      %13 = sbr.rel (%p11) target = $region8
    $region5: #{get_mask.4} parent=1 // loop_body
      %s15 = ssub.s32 %s10, 1
      %s16 = ssub.s32 %s10, 2
      %s23 = sadd.s32 1, %s18
      %p24 = scmp.ge.s32.totalorder %s23, 1
      %s25 = scalar_select %p24, 0, %s23
      %s26 = sadd.s32 1, %s17
      %s27 = scalar_select %p24, %s26, %s17
      %p28 = scmp.ge.s32.totalorder %s27, 2
      %s29 = scalar_select %p28, 0, %s27
      %s31 = sadd.s32 %s30, 1
      %p34 = scmp.eq.s32.totalorder %s10, 1
      %p35 = scmp.ne.s32.totalorder %s30, %s32
      %p36 = scmp.eq.s32.totalorder %s10, 0
      %p37 = por %p35, %p36
      %p38 = scmp.ne.s32.totalorder %s30, %s32
      %p39 = scmp.eq.s32.totalorder %s15, 1
      %p40 = por %p38, %p39
      %p41 = scmp.ne.s32.totalorder %s32, %s33
      %p42 = scmp.eq.s32.totalorder %s15, 0
      %p43 = por %p41, %p42
      %p44 = scmp.ne.s32.totalorder %s32, %s33
      %p45 = scmp.eq.s32.totalorder %s16, 1
      %p46 = por %p44, %p45
      %p48 = scmp.ne.s32.totalorder %s33, %s47
      %p49 = scmp.eq.s32.totalorder %s16, 0
      %p50 = por %p48, %p49
      %s51 = ssub.s32 %s17, %s29
      %s52 = ssub.s32 %s18, %s25
      %s53 = sor.u32 %s51, %s52
      %p54 = scmp.eq.s32.totalorder %s53, 0
      %s56 = sadd.s32 %s55, 1
      %s57 = scalar_select %p54, %s55, %s56
      %p60 = pneg %p54
      %p61 = scmp.eq.s32.totalorder %s10, 1
      %p62 = por %p60, %p61
      %p63 = scmp.ne.s32.totalorder %s55, %s58
      %p64 = scmp.eq.s32.totalorder %s10, 0
      %p65 = por %p63, %p64
      %p66 = scmp.ne.s32.totalorder %s55, %s58
      %p67 = scmp.eq.s32.totalorder %s15, 1
      %p68 = por %p66, %p67
      %p69 = scmp.ne.s32.totalorder %s58, %s59
      %p70 = scmp.eq.s32.totalorder %s15, 0
      %p71 = por %p69, %p70
      %p72 = scmp.ne.s32.totalorder %s58, %s59
      %p73 = scmp.eq.s32.totalorder %s16, 1
      %p74 = por %p72, %p73
      %p76 = scmp.ne.s32.totalorder %s59, %s75
      %p77 = scmp.eq.s32.totalorder %s16, 0
      %p78 = por %p76, %p77
      %s79 = ssub.s32 %s17, %s29
      %s80 = ssub.s32 %s18, %s25
      %s81 = sor.u32 %s79, %s80
      %p82 = scmp.eq.s32.totalorder %s81, 0
      %s84 = sadd.s32 %s83, 1
      %s85 = scalar_select %p82, %s83, %s84
      %p88 = pneg %p82
      %p89 = scmp.eq.s32.totalorder %s10, 1
      %p90 = por %p88, %p89
      %p91 = scmp.ne.s32.totalorder %s83, %s86
      %p92 = scmp.eq.s32.totalorder %s10, 0
      %p93 = por %p91, %p92
      %p94 = scmp.ne.s32.totalorder %s83, %s86
      %p95 = scmp.eq.s32.totalorder %s15, 1
      %p96 = por %p94, %p95
      %p97 = scmp.ne.s32.totalorder %s86, %s87
      %p98 = scmp.eq.s32.totalorder %s15, 0
      %p99 = por %p97, %p98
      %p100 = scmp.ne.s32.totalorder %s86, %s87
      %p101 = scmp.eq.s32.totalorder %s16, 1
      %p102 = por %p100, %p101
      %p104 = scmp.ne.s32.totalorder %s87, %s103
      %p105 = scmp.eq.s32.totalorder %s16, 0
      %p106 = por %p104, %p105
      %s107 = ssub.s32 %s17, %s29
      %s108 = ssub.s32 %s18, %s25
      %s109 = sor.u32 %s107, %s108
      %p110 = scmp.eq.s32.totalorder %s109, 0
      %s112 = sadd.s32 %s111, 1
      %s113 = scalar_select %p110, %s111, %s112
      %p116 = pneg %p110
      %p117 = scmp.eq.s32.totalorder %s10, 1
      %p118 = por %p116, %p117
      %p119 = scmp.ne.s32.totalorder %s111, %s114
      %p120 = scmp.eq.s32.totalorder %s10, 0
      %p121 = por %p119, %p120
      %p122 = scmp.ne.s32.totalorder %s111, %s114
      %p123 = scmp.eq.s32.totalorder %s15, 1
      %p124 = por %p122, %p123
      %p125 = scmp.ne.s32.totalorder %s114, %s115
      %p126 = scmp.eq.s32.totalorder %s15, 0
      %p127 = por %p125, %p126
      %p128 = scmp.ne.s32.totalorder %s114, %s115
      %p129 = scmp.eq.s32.totalorder %s16, 1
      %p130 = por %p128, %p129
      %p132 = scmp.ne.s32.totalorder %s115, %s131
      %p133 = scmp.eq.s32.totalorder %s16, 0
      %p134 = por %p132, %p133
      %p135 = scmp.le.s32.totalorder 1, %s10
      %p136 = scmp.lt.s32.totalorder %s10, 3
      %p137 = pnand %p135, %p136
      %p138 = pneg %p137
      // Predicated region
      $region9: #{get_mask.4} parent=5 // pred_check
        _
      $region10: #{get_mask.4} parent=5 // pred_check_branch
        %140 = sbr.rel (%p137) target = $region12
      $region11: #{get_mask.4} parent=5 // pred_region
        %s141 = ssub.s32 %s10, 1
        // Predicated region
        $region13: #{get_mask.4} parent=11 // pred_check
          %p142 = pneg %p43
        $region14: #{get_mask.4} parent=11 // pred_check_branch
          %144 = sbr.rel (%p142) target = $region16
        $region15: #{get_mask.4} parent=11 // pred_region
          %s146 = ssub.s32 16, 16
          %147 = vsyncadd [#allocation3], %s146
          %s149 = sshll.u32 %s0, 4
          %s150 = int_to_ptr.vmem [resolvable:$true] %s149
          %152 = dma.vmem_to_smem %s150, 16, [#allocation2], [#allocation3]
        $region16: #{get_mask.4} parent=11 // pred_fallthru
          _
      $region12: #{get_mask.4} parent=5 // pred_fallthru
        _
      %p153 = scmp.lt.s32.totalorder %s10, 2
      // Predicated region
      $region17: #{get_mask.4} parent=5 // pred_check
        %p154 = pneg %p153
      $region18: #{get_mask.4} parent=5 // pred_check_branch
        %156 = sbr.rel (%p154) target = $region20
      $region19: #{get_mask.4} parent=5 // pred_region
        // Predicated region
        $region21: #{get_mask.4} parent=19 // pred_check
          %p157 = pneg %p65
        $region22: #{get_mask.4} parent=19 // pred_check_branch
          %159 = sbr.rel (%p157) target = $region24
        $region23: #{get_mask.4} parent=19 // pred_region
          %s160 = smul.u32 2, %s18
          %p161 = scmp.lt.s32.totalorder %s17, 1
          %s162 = scalar_select %p161, %s17, 1
          %p163 = scmp.lt.s32.totalorder %s160, 1
          %s164 = scalar_select %p163, %s160, 1
          %s165 = smul.addr %s162, 6
          %s166 = sadd.s32 %s164, %s165
          %s167 = smul.addr %s166, 8
          %s168 = scalar_lea.vmem %s1, %s167
          %s169 = smul.u32 2, %s18
        $region24: #{get_mask.4} parent=19 // pred_fallthru
          _
        // Predicated region
        $region25: #{get_mask.4} parent=19 // pred_check
          %p170 = pneg %p93
        $region26: #{get_mask.4} parent=19 // pred_check_branch
          %172 = sbr.rel (%p170) target = $region28
        $region27: #{get_mask.4} parent=19 // pred_region
          %s173 = smul.u32 2, %s18
          %p174 = scmp.lt.s32.totalorder %s17, 1
          %s175 = scalar_select %p174, %s17, 1
          %p176 = scmp.lt.s32.totalorder %s173, 1
          %s177 = scalar_select %p176, %s173, 1
          %s178 = smul.addr %s175, 6
          %s179 = sadd.s32 %s177, %s178
          %s180 = smul.addr %s179, 8
          %s181 = scalar_lea.vmem %s2, %s180
          %s182 = smul.u32 2, %s18
        $region28: #{get_mask.4} parent=19 // pred_fallthru
          _
      $region20: #{get_mask.4} parent=5 // pred_fallthru
        _
      %p183 = scmp.le.s32.totalorder 1, %s10
      %p184 = scmp.lt.s32.totalorder %s10, 3
      %p185 = pnand %p183, %p184
      %p186 = pneg %p185
      // Predicated region
      $region29: #{get_mask.4} parent=5 // pred_check
        _
      $region30: #{get_mask.4} parent=5 // pred_check_branch
        %188 = sbr.rel (%p185) target = $region32
      $region31: #{get_mask.4} parent=5 // pred_region
        %s189 = ssub.s32 %s10, 1
        // Predicated region
        $region33: #{get_mask.4} parent=31 // pred_check
          %p190 = pneg %p43
        $region34: #{get_mask.4} parent=31 // pred_check_branch
          %192 = sbr.rel (%p190) target = $region36
        $region35: #{get_mask.4} parent=31 // pred_region
          %193 = dma.done [#allocation3], 16
        $region36: #{get_mask.4} parent=31 // pred_fallthru
          _
        %194 = sfence
        %p195 = pneg %p43
        %p196 = pneg %p40
        %s197 = smul.u32 2, %s20
        %p198 = scmp.lt.s32.totalorder %s19, 1
        %s199 = scalar_select %p198, %s19, 1
        %p200 = scmp.lt.s32.totalorder %s197, 1
        %s201 = scalar_select %p200, %s197, 1
        %s202 = smul.addr %s199, 6
        %s203 = sadd.s32 %s201, %s202
        %s204 = smul.addr %s203, 8
        %s205 = scalar_lea.vmem %s1, %s204
        %p206 = pneg %p71
        %p207 = pneg %p68
        %s208 = smul.u32 2, %s20
        %p209 = scmp.lt.s32.totalorder %s19, 1
        %s210 = scalar_select %p209, %s19, 1
        %p211 = scmp.lt.s32.totalorder %s208, 1
        %s212 = scalar_select %p211, %s208, 1
        %s213 = smul.addr %s210, 6
        %s214 = sadd.s32 %s212, %s213
        %s215 = smul.addr %s214, 8
        %s216 = scalar_lea.vmem %s2, %s215
        %p217 = pneg %p99
        %p218 = pneg %p96
        %p219 = pneg %p127
        %p220 = pneg %p124
        %s221 = smul.u32 2, %s20
        %p222 = scmp.lt.s32.totalorder %s19, 1
        %s223 = scalar_select %p222, %s19, 1
        %p224 = scmp.lt.s32.totalorder %s221, 1
        %s225 = scalar_select %p224, %s221, 1
        %s226 = smul.addr %s223, 2
        %s227 = sadd.s32 %s225, %s226
        %s228 = smul.addr %s227, 8
        %s229 = scalar_lea.vmem %s3, %s228
        %s230 = smul.u32 2, %s20
        %p231 = scmp.lt.s32.totalorder %s19, 1
        %s232 = scalar_select %p231, %s19, 1
        %p233 = scmp.lt.s32.totalorder %s230, 1
        %s234 = scalar_select %p233, %s230, 1
        %s235 = smul.addr %s232, 6
        %s236 = sadd.s32 %s234, %s235
        %s237 = smul.addr %s236, 8
        %s238 = scalar_lea.vmem %s1, %s237
        %s239 = smul.u32 2, %s20
        %s240 = smul.u32 2, %s20
        %p241 = scmp.lt.s32.totalorder %s19, 1
        %s242 = scalar_select %p241, %s19, 1
        %p243 = scmp.lt.s32.totalorder %s240, 1
        %s244 = scalar_select %p243, %s240, 1
        %s245 = smul.addr %s242, 6
        %s246 = sadd.s32 %s244, %s245
        %s247 = smul.addr %s246, 8
        %s248 = scalar_lea.vmem %s2, %s247
        %s249 = smul.u32 2, %s20
        %s250 = smul.u32 2, %s20
        %p251 = scmp.lt.s32.totalorder %s19, 1
        %s252 = scalar_select %p251, %s19, 1
        %p253 = scmp.lt.s32.totalorder %s250, 1
        %s254 = scalar_select %p253, %s250, 1
        %s255 = smul.addr %s252, 2
        %s256 = sadd.s32 %s254, %s255
        %s257 = smul.addr %s256, 8
        %s258 = scalar_lea.vmem %s3, %s257
        %s259 = smul.u32 2, %s20
        %s260 = sld [smem:[#allocation2]]
        %s261 = sld [smem:[#allocation2 + $0x1]]
        %s262 = sld [smem:[#allocation2 + $0x2]]
        %s263 = sld [smem:[#allocation2 + $0x3]]
        %v264 = vld [vmem:[%s238] sm:$0xff]
        %v265 = vld [vmem:[%s238 + $0x8] sm:$0xff]
        %v266 = vld [vmem:[%s238 + $0x10] sm:$0xff]
        %v267 = vld [vmem:[%s238 + $0x18] sm:$0xff]
        %v268 = vld [vmem:[%s238 + $0x20] sm:$0xff]
        %v269 = vld [vmem:[%s238 + $0x28] sm:$0xff]
        %v270 = vld [vmem:[%s248] sm:$0xff]
        %v271 = vld [vmem:[%s248 + $0x8] sm:$0xff]
        %v272 = vld [vmem:[%s248 + $0x10] sm:$0xff]
        %v273 = vld [vmem:[%s248 + $0x18] sm:$0xff]
        %v274 = vld [vmem:[%s248 + $0x20] sm:$0xff]
        %v275 = vld [vmem:[%s248 + $0x28] sm:$0xff]
        %v276 = vstv %s260
        %v277 = vmul.f32 %v264, %v276
        %v278 = vmul.f32 %v265, %v276
        %v279 = vmul.f32 %v266, %v276
        %v280 = vmul.f32 %v267, %v276
        %v281 = vmul.f32 %v268, %v276
        %v282 = vmul.f32 %v269, %v276
        %v283 = vmax.f32 %v277, 0.0
        %v284 = vmax.f32 %v278, 0.0
        %v285 = vmax.f32 %v279, 0.0
        %v286 = vmax.f32 %v280, 0.0
        %v287 = vmax.f32 %v281, 0.0
        %v288 = vmax.f32 %v282, 0.0
        %v289 = vmin.f32 %v283, 1.0
        %v290 = vmin.f32 %v284, 1.0
        %v291 = vmin.f32 %v285, 1.0
        %v292 = vmin.f32 %v286, 1.0
        %v293 = vmin.f32 %v287, 1.0
        %v294 = vmin.f32 %v288, 1.0
        %v295 = vstv %s261
        %v296 = vsub.f32 %v289, %v295
        %v297 = vsub.f32 %v290, %v295
        %v298 = vsub.f32 %v291, %v295
        %v299 = vsub.f32 %v292, %v295
        %v300 = vsub.f32 %v293, %v295
        %v301 = vsub.f32 %v294, %v295
        %v302 = vstv %s262
        %v303 = vmul.f32 %v296, %v302
        %v304 = vmul.f32 %v297, %v302
        %v305 = vmul.f32 %v298, %v302
        %v306 = vmul.f32 %v299, %v302
        %v307 = vmul.f32 %v300, %v302
        %v308 = vmul.f32 %v301, %v302
        %v309 = vstv %s263
        %v310 = vadd.f32 %v303, %v309
        %v311 = vadd.f32 %v304, %v309
        %v312 = vadd.f32 %v305, %v309
        %v313 = vadd.f32 %v306, %v309
        %v314 = vadd.f32 %v307, %v309
        %v315 = vadd.f32 %v308, %v309
        %v316 = vsub.f32 %v310, %v270
        %v317 = vsub.f32 %v311, %v271
        %v318 = vsub.f32 %v312, %v272
        %v319 = vsub.f32 %v313, %v273
        %v320 = vsub.f32 %v314, %v274
        %v321 = vsub.f32 %v315, %v275
        %v322 = vand.u32 2147483647, %v316
        %v323 = vand.u32 2147483647, %v317
        %v324 = vand.u32 2147483647, %v318
        %v325 = vand.u32 2147483647, %v319
        %v326 = vand.u32 2147483647, %v320
        %v327 = vand.u32 2147483647, %v321
        %vm328 = vcmp.gt.f32.partialorder %v322, 0.3
        %vm329 = vcmp.gt.f32.partialorder %v323, 0.3
        %vm330 = vcmp.gt.f32.partialorder %v324, 0.3
        %vm331 = vcmp.gt.f32.partialorder %v325, 0.3
        %vm332 = vcmp.gt.f32.partialorder %v326, 0.3
        %vm333 = vcmp.gt.f32.partialorder %v327, 0.3
        %v334 = vsel %vm328, 1, 0
        %v335 = vsel %vm329, 1, 0
        %v336 = vsel %vm330, 1, 0
        %v337 = vsel %vm331, 1, 0
        %v338 = vsel %vm332, 1, 0
        %v339 = vsel %vm333, 1, 0
        %v340 = vcvt.s32.f32 %v334
        %v341 = vcvt.s32.f32 %v335
        %v342 = vcvt.s32.f32 %v336
        %v343 = vcvt.s32.f32 %v337
        %v344 = vcvt.s32.f32 %v338
        %v345 = vcvt.s32.f32 %v339
        %vm346 = vcmask 130048
        %v347 = vsel %vm346, %v340, -inf
        %v348 = vsel %vm346, %v342, -inf
        %v349 = vsel %vm346, %v344, -inf
        %v350 = vmax.f32 %v347, %v349
        %v351 = vmax.f32 %v350, %v348
        %v352 = vsel %vm346, %v341, -inf
        %v353 = vsel %vm346, %v343, -inf
        %v354 = vsel %vm346, %v345, -inf
        %v355 = vmax.f32 %v352, %v354
        %v356 = vmax.f32 %v355, %v353
        %357 = vst.msk [vmem:[%s258] sm:$0xff] %vm346, %v351
        %358 = vst.msk [vmem:[%s258 + $0x8] sm:$0xff] %vm346, %v356
        %s359 = smul.u32 2, %s20
        %p360 = scmp.lt.s32.totalorder %s19, 1
        %s361 = scalar_select %p360, %s19, 1
        %p362 = scmp.lt.s32.totalorder %s359, 1
        %s363 = scalar_select %p362, %s359, 1
        %s364 = smul.addr %s361, 2
        %s365 = sadd.s32 %s363, %s364
        %s366 = smul.addr %s365, 8
        %s367 = scalar_lea.vmem %s3, %s366
        // Predicated region
        $region37: #{get_mask.4} parent=31 // pred_check
          %p368 = pneg %p124
        $region38: #{get_mask.4} parent=31 // pred_check_branch
          %370 = sbr.rel (%p368) target = $region40
        $region39: #{get_mask.4} parent=31 // pred_region
          %s371 = smul.u32 2, %s20
        $region40: #{get_mask.4} parent=31 // pred_fallthru
          _
      $region32: #{get_mask.4} parent=5 // pred_fallthru
        _
      %p372 = scmp.le.s32.totalorder 2, %s10
      // Predicated region
      $region41: #{get_mask.4} parent=5 // pred_check
        %p373 = pneg %p372
      $region42: #{get_mask.4} parent=5 // pred_check_branch
        %375 = sbr.rel (%p373) target = $region44
      $region43: #{get_mask.4} parent=5 // pred_region
        %s376 = ssub.s32 %s10, 2
        // Predicated region
        $region45: #{get_mask.4} parent=43 // pred_check
          %p377 = pneg %p130
        $region46: #{get_mask.4} parent=43 // pred_check_branch
          %379 = sbr.rel (%p377) target = $region48
        $region47: #{get_mask.4} parent=43 // pred_region
          %s380 = smul.u32 2, %s22
          %p381 = scmp.lt.s32.totalorder %s21, 1
          %s382 = scalar_select %p381, %s21, 1
          %p383 = scmp.lt.s32.totalorder %s380, 1
          %s384 = scalar_select %p383, %s380, 1
          %s385 = smul.addr %s382, 2
          %s386 = sadd.s32 %s384, %s385
          %s387 = smul.addr %s386, 8
          %s388 = scalar_lea.vmem %s3, %s387
        $region48: #{get_mask.4} parent=43 // pred_fallthru
          _
      $region44: #{get_mask.4} parent=5 // pred_fallthru
        _
    $region6: #{get_mask.4} parent=1 // loop_footer
      %s14 = sadd.s32 1, %s10
    $region7: #{get_mask.4} parent=1 // loop_footer_branch
      %9 = sbr.rel target = $region3
    $region8: #{get_mask.4} parent=1 // loop_exit
      _
    %389 = vsyncpa [#allocation3], 1
    %s390 = scalar_lea.sflag [#allocation3], 1
    %391 = vsyncpa %s390, 1

// kernel: get_mask.5
$region0: #{get_mask.5}
  #allocation0 [shape = 'u32[]', space=smem, size = 0x4, offset = 0x4, fixed_abs, tag = 'smem constant byte address 0x4 - core index']
  #allocation1 [shape = 'u32[144,128]{1,0:T(1,128)}', space=vmem, size = 0x12000, scoped, tag = 'internal scratch']
  #allocation2 [shape = 'f32[36,26]{1,0:T(8,128)}', space=vmem, size = 0x5000, scoped, tag = 'scratch operand']
  #allocation3 [shape = 'f32[26,26]{1,0:T(8,128)}', space=vmem, size = 0x4000, scoped, tag = 'scratch operand']
  #allocation4 [shape = 'f32[26,26]{1,0:T(8,128)}', space=vmem, size = 0x4000, scoped, tag = 'scratch operand']
  #allocation5 [shape = 'f32[16,26]{1,0:T(8,128)}', space=vmem, size = 0x2000, scoped, tag = 'scratch operand']
  %s0 = inlined_call_operand.vmem [shape: f32[2,16,16], index: 0, kind: input, shape index: {}]
  %s1 = inlined_call_operand.vmem [shape: f32[2,1,10,16], index: 1, kind: input, shape index: {}, may-alias: {1,2}]
  %s2 = inlined_call_operand.vmem [shape: f32[2,1,10,16], index: 2, kind: input, shape index: {}, may-alias: {1,2}]
  %s3 = inlined_call_operand.vmem [shape: f32[2,16,16], index: 3, kind: output, shape index: {0}]
  %s4 = inlined_call_operand.vmem [shape: f32[2,16,16], index: 4, kind: output, shape index: {1}]
  %5 = xla_tuple %s3, %s4
  %s6 = sld [smem:[#allocation0]]
  $region53: #{get_mask.5} parent=0
    _
  %s8 = ssub.s32 1, %s6
  %s9 = scalar_select 0, %s8, %s6
  loop: start=0, step=1, limit=4
  $region2: #{get_mask.5} parent=0 // loop_pre_header
    _
  $region3: #{get_mask.5} parent=0 // loop_header
    %s11 = sphi 0, %s15
    %p12 = scmp.ge.s32.totalorder %s11, 4
    %s18 = sphi 0, %s30
    %s19 = sphi 0, %s26
    %s20 = sphi 0, %s18
    %s21 = sphi 0, %s19
    %s22 = sphi 0, %s20
    %s23 = sphi 0, %s21
    %s35 = sphi 0, %s37
    %s38 = sphi 0, %s35
    %s39 = sphi 0, %s38
    %s55 = sphi 0, %s39
    %s63 = sphi 0, %s65
    %s66 = sphi 0, %s63
    %s67 = sphi 0, %s66
    %s83 = sphi 0, %s67
    %s91 = sphi 0, %s93
    %s94 = sphi 0, %s91
    %s95 = sphi 0, %s94
    %s111 = sphi 0, %s95
    %s119 = sphi 0, %s121
    %s122 = sphi 0, %s119
    %s123 = sphi 0, %s122
    %s139 = sphi 0, %s123
    %s147 = sphi 0, %s149
    %s150 = sphi 0, %s147
    %s151 = sphi 0, %s150
    %s167 = sphi 0, %s151
  $region4: #{get_mask.5} parent=0 // loop_header_branch
    %14 = sbr.rel (%p12) target = $region8
  $region5: #{get_mask.5} parent=0 // loop_body
    %s16 = ssub.s32 %s11, 1
    %s17 = ssub.s32 %s11, 2
    %s24 = sadd.s32 1, %s19
    %p25 = scmp.ge.s32.totalorder %s24, 1
    %s26 = scalar_select %p25, 0, %s24
    %s27 = sadd.s32 1, %s18
    %s28 = scalar_select %p25, %s27, %s18
    %p29 = scmp.ge.s32.totalorder %s28, 2
    %s30 = scalar_select %p29, 0, %s28
    %s31 = ssub.s32 %s18, %s30
    %s32 = ssub.s32 %s19, %s26
    %s33 = sor.u32 %s31, %s32
    %p34 = scmp.eq.s32.totalorder %s33, 0
    %s36 = sadd.s32 %s35, 1
    %s37 = scalar_select %p34, %s35, %s36
    %p40 = pneg %p34
    %p41 = scmp.eq.s32.totalorder %s11, 1
    %p42 = por %p40, %p41
    %p43 = scmp.ne.s32.totalorder %s35, %s38
    %p44 = scmp.eq.s32.totalorder %s11, 0
    %p45 = por %p43, %p44
    %p46 = scmp.ne.s32.totalorder %s35, %s38
    %p47 = scmp.eq.s32.totalorder %s16, 1
    %p48 = por %p46, %p47
    %p49 = scmp.ne.s32.totalorder %s38, %s39
    %p50 = scmp.eq.s32.totalorder %s16, 0
    %p51 = por %p49, %p50
    %p52 = scmp.ne.s32.totalorder %s38, %s39
    %p53 = scmp.eq.s32.totalorder %s17, 1
    %p54 = por %p52, %p53
    %p56 = scmp.ne.s32.totalorder %s39, %s55
    %p57 = scmp.eq.s32.totalorder %s17, 0
    %p58 = por %p56, %p57
    %s59 = ssub.s32 %s18, %s30
    %s60 = ssub.s32 %s19, %s26
    %s61 = sor.u32 %s59, %s60
    %p62 = scmp.eq.s32.totalorder %s61, 0
    %s64 = sadd.s32 %s63, 1
    %s65 = scalar_select %p62, %s63, %s64
    %p68 = pneg %p62
    %p69 = scmp.eq.s32.totalorder %s11, 1
    %p70 = por %p68, %p69
    %p71 = scmp.ne.s32.totalorder %s63, %s66
    %p72 = scmp.eq.s32.totalorder %s11, 0
    %p73 = por %p71, %p72
    %p74 = scmp.ne.s32.totalorder %s63, %s66
    %p75 = scmp.eq.s32.totalorder %s16, 1
    %p76 = por %p74, %p75
    %p77 = scmp.ne.s32.totalorder %s66, %s67
    %p78 = scmp.eq.s32.totalorder %s16, 0
    %p79 = por %p77, %p78
    %p80 = scmp.ne.s32.totalorder %s66, %s67
    %p81 = scmp.eq.s32.totalorder %s17, 1
    %p82 = por %p80, %p81
    %p84 = scmp.ne.s32.totalorder %s67, %s83
    %p85 = scmp.eq.s32.totalorder %s17, 0
    %p86 = por %p84, %p85
    %s87 = ssub.s32 %s18, %s30
    %s88 = ssub.s32 %s19, %s26
    %s89 = sor.u32 %s87, %s88
    %p90 = scmp.eq.s32.totalorder %s89, 0
    %s92 = sadd.s32 %s91, 1
    %s93 = scalar_select %p90, %s91, %s92
    %p96 = pneg %p90
    %p97 = scmp.eq.s32.totalorder %s11, 1
    %p98 = por %p96, %p97
    %p99 = scmp.ne.s32.totalorder %s91, %s94
    %p100 = scmp.eq.s32.totalorder %s11, 0
    %p101 = por %p99, %p100
    %p102 = scmp.ne.s32.totalorder %s91, %s94
    %p103 = scmp.eq.s32.totalorder %s16, 1
    %p104 = por %p102, %p103
    %p105 = scmp.ne.s32.totalorder %s94, %s95
    %p106 = scmp.eq.s32.totalorder %s16, 0
    %p107 = por %p105, %p106
    %p108 = scmp.ne.s32.totalorder %s94, %s95
    %p109 = scmp.eq.s32.totalorder %s17, 1
    %p110 = por %p108, %p109
    %p112 = scmp.ne.s32.totalorder %s95, %s111
    %p113 = scmp.eq.s32.totalorder %s17, 0
    %p114 = por %p112, %p113
    %s115 = ssub.s32 %s18, %s30
    %s116 = ssub.s32 %s19, %s26
    %s117 = sor.u32 %s115, %s116
    %p118 = scmp.eq.s32.totalorder %s117, 0
    %s120 = sadd.s32 %s119, 1
    %s121 = scalar_select %p118, %s119, %s120
    %p124 = pneg %p118
    %p125 = scmp.eq.s32.totalorder %s11, 1
    %p126 = por %p124, %p125
    %p127 = scmp.ne.s32.totalorder %s119, %s122
    %p128 = scmp.eq.s32.totalorder %s11, 0
    %p129 = por %p127, %p128
    %p130 = scmp.ne.s32.totalorder %s119, %s122
    %p131 = scmp.eq.s32.totalorder %s16, 1
    %p132 = por %p130, %p131
    %p133 = scmp.ne.s32.totalorder %s122, %s123
    %p134 = scmp.eq.s32.totalorder %s16, 0
    %p135 = por %p133, %p134
    %p136 = scmp.ne.s32.totalorder %s122, %s123
    %p137 = scmp.eq.s32.totalorder %s17, 1
    %p138 = por %p136, %p137
    %p140 = scmp.ne.s32.totalorder %s123, %s139
    %p141 = scmp.eq.s32.totalorder %s17, 0
    %p142 = por %p140, %p141
    %s143 = ssub.s32 %s18, %s30
    %s144 = ssub.s32 %s19, %s26
    %s145 = sor.u32 %s143, %s144
    %p146 = scmp.eq.s32.totalorder %s145, 0
    %s148 = sadd.s32 %s147, 1
    %s149 = scalar_select %p146, %s147, %s148
    %p152 = pneg %p146
    %p153 = scmp.eq.s32.totalorder %s11, 1
    %p154 = por %p152, %p153
    %p155 = scmp.ne.s32.totalorder %s147, %s150
    %p156 = scmp.eq.s32.totalorder %s11, 0
    %p157 = por %p155, %p156
    %p158 = scmp.ne.s32.totalorder %s147, %s150
    %p159 = scmp.eq.s32.totalorder %s16, 1
    %p160 = por %p158, %p159
    %p161 = scmp.ne.s32.totalorder %s150, %s151
    %p162 = scmp.eq.s32.totalorder %s16, 0
    %p163 = por %p161, %p162
    %p164 = scmp.ne.s32.totalorder %s150, %s151
    %p165 = scmp.eq.s32.totalorder %s17, 1
    %p166 = por %p164, %p165
    %p168 = scmp.ne.s32.totalorder %s151, %s167
    %p169 = scmp.eq.s32.totalorder %s17, 0
    %p170 = por %p168, %p169
    %p171 = scmp.le.s32.totalorder 1, %s11
    %p172 = scmp.lt.s32.totalorder %s11, 3
    %p173 = pnand %p171, %p172
    %p174 = pneg %p173
    // Predicated region
    $region9: #{get_mask.5} parent=5 // pred_check
      _
    $region10: #{get_mask.5} parent=5 // pred_check_branch
      %176 = sbr.rel (%p173) target = $region12
    $region11: #{get_mask.5} parent=5 // pred_region
      %s177 = ssub.s32 %s11, 1
    $region12: #{get_mask.5} parent=5 // pred_fallthru
      _
    %p178 = scmp.lt.s32.totalorder %s11, 2
    // Predicated region
    $region13: #{get_mask.5} parent=5 // pred_check
      %p179 = pneg %p178
    $region14: #{get_mask.5} parent=5 // pred_check_branch
      %181 = sbr.rel (%p179) target = $region16
    $region15: #{get_mask.5} parent=5 // pred_region
      // Predicated region
      $region17: #{get_mask.5} parent=15 // pred_check
        %p182 = pneg %p45
      $region18: #{get_mask.5} parent=15 // pred_check_branch
        %184 = sbr.rel (%p182) target = $region20
      $region19: #{get_mask.5} parent=15 // pred_region
        %s185 = smul.u32 2, %s19
        %p186 = scmp.lt.s32.totalorder %s18, 1
        %s187 = scalar_select %p186, %s18, 1
        %p188 = scmp.lt.s32.totalorder %s185, 1
        %s189 = scalar_select %p188, %s185, 1
        %s190 = smul.addr %s187, 2
        %s191 = sadd.s32 %s189, %s190
        %s192 = smul.addr %s191, 8
        %s193 = scalar_lea.vmem %s0, %s192
        %s194 = smul.u32 2, %s19
      $region20: #{get_mask.5} parent=15 // pred_fallthru
        _
      // Predicated region
      $region21: #{get_mask.5} parent=15 // pred_check
        %p195 = pneg %p73
      $region22: #{get_mask.5} parent=15 // pred_check_branch
        %197 = sbr.rel (%p195) target = $region24
      $region23: #{get_mask.5} parent=15 // pred_region
        %p198 = scmp.lt.s32.totalorder %s18, 1
        %s199 = scalar_select %p198, %s18, 1
        %p200 = scmp.lt.s32.totalorder %s19, 0
        %s201 = scalar_select %p200, %s19, 0
        %s202 = smul.addr %s201, 2
        %s203 = smul.addr %s199, 2
        %s204 = sadd.s32 %s202, %s203
        %s205 = smul.addr %s204, 8
        %s206 = scalar_lea.vmem %s1, %s205
      $region24: #{get_mask.5} parent=15 // pred_fallthru
        _
      // Predicated region
      $region25: #{get_mask.5} parent=15 // pred_check
        %p207 = pneg %p101
      $region26: #{get_mask.5} parent=15 // pred_check_branch
        %209 = sbr.rel (%p207) target = $region28
      $region27: #{get_mask.5} parent=15 // pred_region
        %p210 = scmp.lt.s32.totalorder %s18, 1
        %s211 = scalar_select %p210, %s18, 1
        %p212 = scmp.lt.s32.totalorder %s19, 0
        %s213 = scalar_select %p212, %s19, 0
        %s214 = smul.addr %s213, 2
        %s215 = smul.addr %s211, 2
        %s216 = sadd.s32 %s214, %s215
        %s217 = smul.addr %s216, 8
        %s218 = scalar_lea.vmem %s2, %s217
      $region28: #{get_mask.5} parent=15 // pred_fallthru
        _
    $region16: #{get_mask.5} parent=5 // pred_fallthru
      _
    %p219 = scmp.le.s32.totalorder 1, %s11
    %p220 = scmp.lt.s32.totalorder %s11, 3
    %p221 = pnand %p219, %p220
    %p222 = pneg %p221
    // Predicated region
    $region29: #{get_mask.5} parent=5 // pred_check
      _
    $region30: #{get_mask.5} parent=5 // pred_check_branch
      %224 = sbr.rel (%p221) target = $region32
    $region31: #{get_mask.5} parent=5 // pred_region
      %s225 = ssub.s32 %s11, 1
      %s226 = smul.u32 2, %s21
      %p227 = scmp.lt.s32.totalorder %s20, 1
      %s228 = scalar_select %p227, %s20, 1
      %p229 = scmp.lt.s32.totalorder %s226, 1
      %s230 = scalar_select %p229, %s226, 1
      %s231 = smul.addr %s228, 2
      %s232 = sadd.s32 %s230, %s231
      %s233 = smul.addr %s232, 8
      %s234 = scalar_lea.vmem %s0, %s233
      %p235 = pneg %p51
      %p236 = pneg %p48
      %p237 = scmp.lt.s32.totalorder %s20, 1
      %s238 = scalar_select %p237, %s20, 1
      %p239 = scmp.lt.s32.totalorder %s21, 0
      %s240 = scalar_select %p239, %s21, 0
      %s241 = smul.addr %s240, 2
      %s242 = smul.addr %s238, 2
      %s243 = sadd.s32 %s241, %s242
      %s244 = smul.addr %s243, 8
      %s245 = scalar_lea.vmem %s1, %s244
      %p246 = pneg %p79
      %p247 = pneg %p76
      %p248 = scmp.lt.s32.totalorder %s20, 1
      %s249 = scalar_select %p248, %s20, 1
      %p250 = scmp.lt.s32.totalorder %s21, 0
      %s251 = scalar_select %p250, %s21, 0
      %s252 = smul.addr %s251, 2
      %s253 = smul.addr %s249, 2
      %s254 = sadd.s32 %s252, %s253
      %s255 = smul.addr %s254, 8
      %s256 = scalar_lea.vmem %s2, %s255
      %p257 = pneg %p107
      %p258 = pneg %p104
      %p259 = pneg %p135
      %p260 = pneg %p132
      %s261 = smul.u32 2, %s21
      %p262 = scmp.lt.s32.totalorder %s20, 1
      %s263 = scalar_select %p262, %s20, 1
      %p264 = scmp.lt.s32.totalorder %s261, 1
      %s265 = scalar_select %p264, %s261, 1
      %s266 = smul.addr %s263, 2
      %s267 = sadd.s32 %s265, %s266
      %s268 = smul.addr %s267, 8
      %s269 = scalar_lea.vmem %s3, %s268
      %p270 = pneg %p163
      %p271 = pneg %p160
      %s272 = smul.u32 2, %s21
      %p273 = scmp.lt.s32.totalorder %s20, 1
      %s274 = scalar_select %p273, %s20, 1
      %p275 = scmp.lt.s32.totalorder %s272, 1
      %s276 = scalar_select %p275, %s272, 1
      %s277 = smul.addr %s274, 2
      %s278 = sadd.s32 %s276, %s277
      %s279 = smul.addr %s278, 8
      %s280 = scalar_lea.vmem %s4, %s279
      %s281 = smul.u32 2, %s21
      %p282 = scmp.lt.s32.totalorder %s20, 1
      %s283 = scalar_select %p282, %s20, 1
      %p284 = scmp.lt.s32.totalorder %s281, 1
      %s285 = scalar_select %p284, %s281, 1
      %s286 = smul.addr %s283, 2
      %s287 = sadd.s32 %s285, %s286
      %s288 = smul.addr %s287, 8
      %s289 = scalar_lea.vmem %s0, %s288
      %s290 = smul.u32 2, %s21
      %p291 = scmp.lt.s32.totalorder %s20, 1
      %s292 = scalar_select %p291, %s20, 1
      %p293 = scmp.lt.s32.totalorder %s21, 0
      %s294 = scalar_select %p293, %s21, 0
      %s295 = smul.addr %s294, 2
      %s296 = smul.addr %s292, 2
      %s297 = sadd.s32 %s295, %s296
      %s298 = smul.addr %s297, 8
      %s299 = scalar_lea.vmem %s1, %s298
      %p300 = scmp.lt.s32.totalorder %s20, 1
      %s301 = scalar_select %p300, %s20, 1
      %p302 = scmp.lt.s32.totalorder %s21, 0
      %s303 = scalar_select %p302, %s21, 0
      %s304 = smul.addr %s303, 2
      %s305 = smul.addr %s301, 2
      %s306 = sadd.s32 %s304, %s305
      %s307 = smul.addr %s306, 8
      %s308 = scalar_lea.vmem %s2, %s307
      %s309 = smul.u32 2, %s21
      %p310 = scmp.lt.s32.totalorder %s20, 1
      %s311 = scalar_select %p310, %s20, 1
      %p312 = scmp.lt.s32.totalorder %s309, 1
      %s313 = scalar_select %p312, %s309, 1
      %s314 = smul.addr %s311, 2
      %s315 = sadd.s32 %s313, %s314
      %s316 = smul.addr %s315, 8
      %s317 = scalar_lea.vmem %s3, %s316
      %s318 = smul.u32 2, %s21
      %s319 = smul.u32 2, %s21
      %p320 = scmp.lt.s32.totalorder %s20, 1
      %s321 = scalar_select %p320, %s20, 1
      %p322 = scmp.lt.s32.totalorder %s319, 1
      %s323 = scalar_select %p322, %s319, 1
      %s324 = smul.addr %s321, 2
      %s325 = sadd.s32 %s323, %s324
      %s326 = smul.addr %s325, 8
      %s327 = scalar_lea.vmem %s4, %s326
      %s328 = smul.u32 2, %s21
      %vm329 = vcmask 211968
      %330 = vst.msk [vmem:[#allocation2] sm:$0xff] %vm329, 1.0
      %331 = vst.msk [vmem:[#allocation2 + $0x8] sm:$0xff] %vm329, 1.0
      %332 = vst.msk [vmem:[#allocation2 + $0x10] sm:$0xff] %vm329, 1.0
      %333 = vst.msk [vmem:[#allocation2 + $0x18] sm:$0xff] %vm329, 1.0
      %vm334 = vcmask 207872
      %335 = vst.msk [vmem:[#allocation2 + $0x20] sm:$0xf] %vm334, 1.0
      %v336 = vld [vmem:[%s299] sm:$0xff]
      %v337 = vld [vmem:[%s299 + $0x8] sm:$0x3]
      %340 = vrot.lane.b32.xlu0 %v336, 5
      %v341 = vpop.permute.xlu0 %340
      %342 = vrot.lane.b32.xlu0 %v337, 5
      %v343 = vpop.permute.xlu0 %342
      %vm346 = vcmask 171048
      %347 = vst.msk [vmem:[#allocation2] sm:$0xff] %vm346, %v341
      %vm348 = vcmask 164904
      %349 = vst.msk [vmem:[#allocation2 + $0x8] sm:$0x3] %vm348, %v343
      %v350 = vld [vmem:[%s289] sm:$0xff]
      %v351 = vld [vmem:[%s289 + $0x8] sm:$0xff]
      %354 = vrot.lane.b32.xlu0 %v350, 5
      %v355 = vpop.permute.xlu0 %354
      %356 = vrot.lane.b32.xlu0 %v351, 5
      %v357 = vpop.permute.xlu0 %356
      %360 = vst.msk [vmem:[#allocation2 + $0xa] sm:$0xff] %vm346, %v355
      %361 = vst.msk [vmem:[#allocation2 + $0x12] sm:$0xff] %vm346, %v357
      %v362 = vld [vmem:[%s308] sm:$0xff]
      %v363 = vld [vmem:[%s308 + $0x8] sm:$0x3]
      %366 = vrot.lane.b32.xlu0 %v362, 5
      %v367 = vpop.permute.xlu0 %366
      %368 = vrot.lane.b32.xlu0 %v363, 5
      %v369 = vpop.permute.xlu0 %368
      %372 = vst.msk [vmem:[#allocation2 + $0x1a] sm:$0xff] %vm346, %v367
      %373 = vst.msk [vmem:[#allocation2 + $0x22] sm:$0x3] %vm348, %v369
      %v374 = vld [vmem:[#allocation2] sm:$0xff]
      %v375 = vld [vmem:[#allocation2 + $0x8] sm:$0xff]
      %v376 = vld [vmem:[#allocation2 + $0x10] sm:$0xff]
      %v377 = vld [vmem:[#allocation2 + $0x18] sm:$0x3]
      %v378 = vld [vmem:[#allocation2 + $0x1] sm:$0xff]
      %v379 = vld [vmem:[#allocation2 + $0x9] sm:$0xff]
      %v380 = vld [vmem:[#allocation2 + $0x11] sm:$0xff]
      %v381 = vld [vmem:[#allocation2 + $0x19] sm:$0x3]
      %v382 = vld [vmem:[#allocation2 + $0x2] sm:$0xff]
      %v383 = vld [vmem:[#allocation2 + $0xa] sm:$0xff]
      %v384 = vld [vmem:[#allocation2 + $0x12] sm:$0xff]
      %v385 = vld [vmem:[#allocation2 + $0x1a] sm:$0x3]
      %v386 = vld [vmem:[#allocation2 + $0x3] sm:$0xff]
      %v387 = vld [vmem:[#allocation2 + $0xb] sm:$0xff]
      %v388 = vld [vmem:[#allocation2 + $0x13] sm:$0xff]
      %v389 = vld [vmem:[#allocation2 + $0x1b] sm:$0x3]
      %v390 = vld [vmem:[#allocation2 + $0x4] sm:$0xff]
      %v391 = vld [vmem:[#allocation2 + $0xc] sm:$0xff]
      %v392 = vld [vmem:[#allocation2 + $0x14] sm:$0xff]
      %v393 = vld [vmem:[#allocation2 + $0x1c] sm:$0x3]
      %v394 = vld [vmem:[#allocation2 + $0x5] sm:$0xff]
      %v395 = vld [vmem:[#allocation2 + $0xd] sm:$0xff]
      %v396 = vld [vmem:[#allocation2 + $0x15] sm:$0xff]
      %v397 = vld [vmem:[#allocation2 + $0x1d] sm:$0x3]
      %v398 = vld [vmem:[#allocation2 + $0x6] sm:$0xff]
      %v399 = vld [vmem:[#allocation2 + $0xe] sm:$0xff]
      %v400 = vld [vmem:[#allocation2 + $0x16] sm:$0xff]
      %v401 = vld [vmem:[#allocation2 + $0x1e] sm:$0x3]
      %v402 = vld [vmem:[#allocation2 + $0x7] sm:$0xff]
      %v403 = vld [vmem:[#allocation2 + $0xf] sm:$0xff]
      %v404 = vld [vmem:[#allocation2 + $0x17] sm:$0xff]
      %v405 = vld [vmem:[#allocation2 + $0x1f] sm:$0x3]
      %v406 = vld [vmem:[#allocation2 + $0x18] sm:$0xff]
      %v407 = vld [vmem:[#allocation2 + $0x20] sm:$0x3]
      %v408 = vld [vmem:[#allocation2 + $0x19] sm:$0xff]
      %v409 = vld [vmem:[#allocation2 + $0x21] sm:$0x3]
      %v410 = vld [vmem:[#allocation2 + $0x1a] sm:$0xff]
      %v411 = vld [vmem:[#allocation2 + $0x22] sm:$0x3]
      %v412 = vmin.f32 %v374, %v378
      %v413 = vmin.f32 %v375, %v379
      %v414 = vmin.f32 %v376, %v380
      %v415 = vmin.f32 %v377, %v381
      %v416 = vmin.f32 %v382, %v386
      %v417 = vmin.f32 %v383, %v387
      %v418 = vmin.f32 %v384, %v388
      %v419 = vmin.f32 %v385, %v389
      %v420 = vmin.f32 %v390, %v394
      %v421 = vmin.f32 %v391, %v395
      %v422 = vmin.f32 %v392, %v396
      %v423 = vmin.f32 %v393, %v397
      %v424 = vmin.f32 %v398, %v402
      %v425 = vmin.f32 %v399, %v403
      %v426 = vmin.f32 %v400, %v404
      %v427 = vmin.f32 %v401, %v405
      %v428 = vmin.f32 %v406, %v408
      %v429 = vmin.f32 %v407, %v409
      %v430 = vmin.f32 %v412, %v416
      %v431 = vmin.f32 %v413, %v417
      %v432 = vmin.f32 %v414, %v418
      %v433 = vmin.f32 %v415, %v419
      %v434 = vmin.f32 %v420, %v424
      %v435 = vmin.f32 %v421, %v425
      %v436 = vmin.f32 %v422, %v426
      %v437 = vmin.f32 %v423, %v427
      %v438 = vmin.f32 %v413, %v383
      %v439 = vmin.f32 %v414, %v384
      %v440 = vmin.f32 %v428, %v410
      %v441 = vmin.f32 %v429, %v411
      %v442 = vmin.f32 %v430, %v434
      %v443 = vmin.f32 %v431, %v435
      %v444 = vmin.f32 %v432, %v436
      %v445 = vmin.f32 %v433, %v437
      %v446 = vmin.f32 %v442, %v438
      %v447 = vmin.f32 %v443, %v439
      %v448 = vmin.f32 %v444, %v440
      %v449 = vmin.f32 %v445, %v441
      %450 = vst.msk [vmem:[#allocation3] sm:$0xff] %vm329, %v446
      %451 = vst.msk [vmem:[#allocation3 + $0x8] sm:$0xff] %vm329, %v447
      %452 = vst.msk [vmem:[#allocation3 + $0x10] sm:$0xff] %vm329, %v448
      %vm453 = vcmask 205824
      %454 = vst.msk [vmem:[#allocation3 + $0x18] sm:$0x3] %vm453, %v449
      %v455 = vld [vmem:[#allocation3] sm:$0xff]
      %v456 = vld [vmem:[#allocation3 + $0x8] sm:$0xff]
      %v457 = vld [vmem:[#allocation3 + $0x10] sm:$0xff]
      %v458 = vld [vmem:[#allocation3 + $0x18] sm:$0x3]
      %463 = vrot.lane.b32.xlu0 %v455, 127
      %v464 = vpop.permute.xlu0 %463
      %465 = vrot.lane.b32.xlu0 %v456, 127
      %v466 = vpop.permute.xlu0 %465
      %467 = vrot.lane.b32.xlu0 %v457, 127
      %v468 = vpop.permute.xlu0 %467
      %469 = vrot.lane.b32.xlu0 %v458, 127
      %v470 = vpop.permute.xlu0 %469
      %v475 = vmin.f32 %v455, %v464
      %v476 = vmin.f32 %v456, %v466
      %v477 = vmin.f32 %v457, %v468
      %v478 = vmin.f32 %v458, %v470
      %483 = vrot.lane.b32.xlu0 %v475, 126
      %v484 = vpop.permute.xlu0 %483
      %485 = vrot.lane.b32.xlu0 %v476, 126
      %v486 = vpop.permute.xlu0 %485
      %487 = vrot.lane.b32.xlu0 %v477, 126
      %v488 = vpop.permute.xlu0 %487
      %489 = vrot.lane.b32.xlu0 %v478, 126
      %v490 = vpop.permute.xlu0 %489
      %v495 = vmin.f32 %v475, %v484
      %v496 = vmin.f32 %v476, %v486
      %v497 = vmin.f32 %v477, %v488
      %v498 = vmin.f32 %v478, %v490
      %499 = vrot.lane.b32.xlu0 %v455, 126
      %v500 = vpop.permute.xlu0 %499
      %501 = vrot.lane.b32.xlu0 %v456, 126
      %v502 = vpop.permute.xlu0 %501
      %503 = vrot.lane.b32.xlu0 %v457, 126
      %v504 = vpop.permute.xlu0 %503
      %505 = vrot.lane.b32.xlu0 %v458, 126
      %v506 = vpop.permute.xlu0 %505
      %v511 = vmin.f32 %v475, %v500
      %v512 = vmin.f32 %v476, %v502
      %v513 = vmin.f32 %v477, %v504
      %v514 = vmin.f32 %v478, %v506
      %519 = vrot.lane.b32.xlu0 %v495, 124
      %v520 = vpop.permute.xlu0 %519
      %521 = vrot.lane.b32.xlu0 %v496, 124
      %v522 = vpop.permute.xlu0 %521
      %523 = vrot.lane.b32.xlu0 %v497, 124
      %v524 = vpop.permute.xlu0 %523
      %525 = vrot.lane.b32.xlu0 %v498, 124
      %v526 = vpop.permute.xlu0 %525
      %v531 = vmin.f32 %v495, %v520
      %v532 = vmin.f32 %v496, %v522
      %v533 = vmin.f32 %v497, %v524
      %v534 = vmin.f32 %v498, %v526
      %539 = vrot.lane.b32.xlu0 %v511, 120
      %v540 = vpop.permute.xlu0 %539
      %541 = vrot.lane.b32.xlu0 %v512, 120
      %v542 = vpop.permute.xlu0 %541
      %543 = vrot.lane.b32.xlu0 %v513, 120
      %v544 = vpop.permute.xlu0 %543
      %545 = vrot.lane.b32.xlu0 %v514, 120
      %v546 = vpop.permute.xlu0 %545
      %v551 = vmin.f32 %v531, %v540
      %v552 = vmin.f32 %v532, %v542
      %v553 = vmin.f32 %v533, %v544
      %v554 = vmin.f32 %v534, %v546
      %s555 = smul.u32 %s21, 16
      %v556 = vlaneseq
      %v557 = vshrl.u32 %v556, 7
      %v558 = vadd.s32 %v557, 8
      %v559 = vadd.s32 %v557, 16
      %v560 = vadd.s32 %v557, 24
      %s561 = ssub.s32 %s555, 5
      %v562 = vstv %s561
      %v563 = vadd.s32 %v557, %v562
      %v564 = vadd.s32 %v558, %v562
      %v565 = vadd.s32 %v559, %v562
      %v566 = vadd.s32 %v560, %v562
      %vm567 = vcmp.ge.s32.totalorder %v563, 0
      %vm568 = vcmp.ge.s32.totalorder %v564, 0
      %vm569 = vcmp.ge.s32.totalorder %v565, 0
      %vm570 = vcmp.ge.s32.totalorder %v566, 0
      %vm571 = vcmp.lt.s32.totalorder %v563, 16
      %vm572 = vcmp.lt.s32.totalorder %v564, 16
      %vm573 = vcmp.lt.s32.totalorder %v565, 16
      %vm574 = vcmp.lt.s32.totalorder %v566, 16
      %vm575 = vmand %vm567, %vm571
      %vm576 = vmand %vm568, %vm572
      %vm577 = vmand %vm569, %vm573
      %vm578 = vmand %vm570, %vm574
      %v579 = vsel %vm575, %v551, 0.0
      %v580 = vsel %vm576, %v552, 0.0
      %v581 = vsel %vm577, %v553, 0.0
      %v582 = vsel %vm578, %v554, 0.0
      %583 = vst.msk [vmem:[#allocation4] sm:$0xff] %vm329, 0.0
      %584 = vst.msk [vmem:[#allocation4 + $0x8] sm:$0xff] %vm329, 0.0
      %585 = vst.msk [vmem:[#allocation4 + $0x10] sm:$0xff] %vm329, 0.0
      %586 = vst.msk [vmem:[#allocation4 + $0x18] sm:$0x3] %vm453, 0.0
      %591 = vrot.lane.b32.xlu0 %v579, 5
      %v592 = vpop.permute.xlu0 %591
      %593 = vrot.lane.b32.xlu0 %v580, 5
      %v594 = vpop.permute.xlu0 %593
      %595 = vrot.lane.b32.xlu0 %v581, 5
      %v596 = vpop.permute.xlu0 %595
      %597 = vrot.lane.b32.xlu0 %v582, 5
      %v598 = vpop.permute.xlu0 %597
      %603 = vst.msk [vmem:[#allocation4] sm:$0xff] %vm346, %v592
      %604 = vst.msk [vmem:[#allocation4 + $0x8] sm:$0xff] %vm346, %v594
      %605 = vst.msk [vmem:[#allocation4 + $0x10] sm:$0xff] %vm346, %v596
      %606 = vst.msk [vmem:[#allocation4 + $0x18] sm:$0x3] %vm348, %v598
      %v607 = vld [vmem:[#allocation4] sm:$0xff]
      %v608 = vld [vmem:[#allocation4 + $0x8] sm:$0xff]
      %v609 = vld [vmem:[#allocation4 + $0x1] sm:$0xff]
      %v610 = vld [vmem:[#allocation4 + $0x9] sm:$0xff]
      %v611 = vld [vmem:[#allocation4 + $0x2] sm:$0xff]
      %v612 = vld [vmem:[#allocation4 + $0xa] sm:$0xff]
      %v613 = vld [vmem:[#allocation4 + $0x3] sm:$0xff]
      %v614 = vld [vmem:[#allocation4 + $0xb] sm:$0xff]
      %v615 = vld [vmem:[#allocation4 + $0x4] sm:$0xff]
      %v616 = vld [vmem:[#allocation4 + $0xc] sm:$0xff]
      %v617 = vld [vmem:[#allocation4 + $0x5] sm:$0xff]
      %v618 = vld [vmem:[#allocation4 + $0xd] sm:$0xff]
      %v619 = vld [vmem:[#allocation4 + $0x6] sm:$0xff]
      %v620 = vld [vmem:[#allocation4 + $0xe] sm:$0xff]
      %v621 = vld [vmem:[#allocation4 + $0x7] sm:$0xff]
      %v622 = vld [vmem:[#allocation4 + $0xf] sm:$0xff]
      %v623 = vld [vmem:[#allocation4 + $0x10] sm:$0xff]
      %v624 = vld [vmem:[#allocation4 + $0x11] sm:$0xff]
      %v625 = vld [vmem:[#allocation4 + $0x12] sm:$0xff]
      %v626 = vmax.f32 %v607, %v609
      %v627 = vmax.f32 %v608, %v610
      %v628 = vmax.f32 %v611, %v613
      %v629 = vmax.f32 %v612, %v614
      %v630 = vmax.f32 %v615, %v617
      %v631 = vmax.f32 %v616, %v618
      %v632 = vmax.f32 %v619, %v621
      %v633 = vmax.f32 %v620, %v622
      %v634 = vmax.f32 %v623, %v624
      %v635 = vmax.f32 %v626, %v628
      %v636 = vmax.f32 %v627, %v629
      %v637 = vmax.f32 %v630, %v632
      %v638 = vmax.f32 %v631, %v633
      %v639 = vmax.f32 %v627, %v612
      %v640 = vmax.f32 %v634, %v625
      %v641 = vmax.f32 %v635, %v637
      %v642 = vmax.f32 %v636, %v638
      %v643 = vmax.f32 %v641, %v639
      %v644 = vmax.f32 %v642, %v640
      %645 = vst.msk [vmem:[#allocation5] sm:$0xff] %vm329, %v643
      %646 = vst.msk [vmem:[#allocation5 + $0x8] sm:$0xff] %vm329, %v644
      %v647 = vld [vmem:[#allocation5] sm:$0xff]
      %v648 = vld [vmem:[#allocation5 + $0x8] sm:$0xff]
      %651 = vrot.lane.b32.xlu0 %v647, 127
      %v652 = vpop.permute.xlu0 %651
      %653 = vrot.lane.b32.xlu0 %v648, 127
      %v654 = vpop.permute.xlu0 %653
      %v657 = vmax.f32 %v647, %v652
      %v658 = vmax.f32 %v648, %v654
      %661 = vrot.lane.b32.xlu0 %v657, 126
      %v662 = vpop.permute.xlu0 %661
      %663 = vrot.lane.b32.xlu0 %v658, 126
      %v664 = vpop.permute.xlu0 %663
      %v667 = vmax.f32 %v657, %v662
      %v668 = vmax.f32 %v658, %v664
      %669 = vrot.lane.b32.xlu0 %v647, 126
      %v670 = vpop.permute.xlu0 %669
      %671 = vrot.lane.b32.xlu0 %v648, 126
      %v672 = vpop.permute.xlu0 %671
      %v675 = vmax.f32 %v657, %v670
      %v676 = vmax.f32 %v658, %v672
      %679 = vrot.lane.b32.xlu0 %v667, 124
      %v680 = vpop.permute.xlu0 %679
      %681 = vrot.lane.b32.xlu0 %v668, 124
      %v682 = vpop.permute.xlu0 %681
      %v685 = vmax.f32 %v667, %v680
      %v686 = vmax.f32 %v668, %v682
      %689 = vrot.lane.b32.xlu0 %v675, 120
      %v690 = vpop.permute.xlu0 %689
      %691 = vrot.lane.b32.xlu0 %v676, 120
      %v692 = vpop.permute.xlu0 %691
      %v695 = vmax.f32 %v685, %v690
      %v696 = vmax.f32 %v686, %v692
      %vm697 = vcmask 130048
      %698 = vst.msk [vmem:[%s317] sm:$0xff] %vm697, %v695
      %699 = vst.msk [vmem:[%s317 + $0x8] sm:$0xff] %vm697, %v696
      %v700 = vsub.f32 1.0, %v695
      %v701 = vsub.f32 1.0, %v696
      %702 = vst.msk [vmem:[%s327] sm:$0xff] %vm697, %v700
      %703 = vst.msk [vmem:[%s327 + $0x8] sm:$0xff] %vm697, %v701
      %s704 = smul.u32 2, %s21
      %p705 = scmp.lt.s32.totalorder %s20, 1
      %s706 = scalar_select %p705, %s20, 1
      %p707 = scmp.lt.s32.totalorder %s704, 1
      %s708 = scalar_select %p707, %s704, 1
      %s709 = smul.addr %s706, 2
      %s710 = sadd.s32 %s708, %s709
      %s711 = smul.addr %s710, 8
      %s712 = scalar_lea.vmem %s3, %s711
      %s713 = smul.u32 2, %s21
      %p714 = scmp.lt.s32.totalorder %s20, 1
      %s715 = scalar_select %p714, %s20, 1
      %p716 = scmp.lt.s32.totalorder %s713, 1
      %s717 = scalar_select %p716, %s713, 1
      %s718 = smul.addr %s715, 2
      %s719 = sadd.s32 %s717, %s718
      %s720 = smul.addr %s719, 8
      %s721 = scalar_lea.vmem %s4, %s720
      // Predicated region
      $region33: #{get_mask.5} parent=31 // pred_check
        %p722 = pneg %p132
      $region34: #{get_mask.5} parent=31 // pred_check_branch
        %724 = sbr.rel (%p722) target = $region36
      $region35: #{get_mask.5} parent=31 // pred_region
        %s725 = smul.u32 2, %s21
      $region36: #{get_mask.5} parent=31 // pred_fallthru
        _
      // Predicated region
      $region37: #{get_mask.5} parent=31 // pred_check
        %p726 = pneg %p160
      $region38: #{get_mask.5} parent=31 // pred_check_branch
        %728 = sbr.rel (%p726) target = $region40
      $region39: #{get_mask.5} parent=31 // pred_region
        %s729 = smul.u32 2, %s21
      $region40: #{get_mask.5} parent=31 // pred_fallthru
        _
    $region32: #{get_mask.5} parent=5 // pred_fallthru
      _
    %p730 = scmp.le.s32.totalorder 2, %s11
    // Predicated region
    $region41: #{get_mask.5} parent=5 // pred_check
      %p731 = pneg %p730
    $region42: #{get_mask.5} parent=5 // pred_check_branch
      %733 = sbr.rel (%p731) target = $region44
    $region43: #{get_mask.5} parent=5 // pred_region
      %s734 = ssub.s32 %s11, 2
      // Predicated region
      $region45: #{get_mask.5} parent=43 // pred_check
        %p735 = pneg %p138
      $region46: #{get_mask.5} parent=43 // pred_check_branch
        %737 = sbr.rel (%p735) target = $region48
      $region47: #{get_mask.5} parent=43 // pred_region
        %s738 = smul.u32 2, %s23
        %p739 = scmp.lt.s32.totalorder %s22, 1
        %s740 = scalar_select %p739, %s22, 1
        %p741 = scmp.lt.s32.totalorder %s738, 1
        %s742 = scalar_select %p741, %s738, 1
        %s743 = smul.addr %s740, 2
        %s744 = sadd.s32 %s742, %s743
        %s745 = smul.addr %s744, 8
        %s746 = scalar_lea.vmem %s3, %s745
      $region48: #{get_mask.5} parent=43 // pred_fallthru
        _
      // Predicated region
      $region49: #{get_mask.5} parent=43 // pred_check
        %p747 = pneg %p166
      $region50: #{get_mask.5} parent=43 // pred_check_branch
        %749 = sbr.rel (%p747) target = $region52
      $region51: #{get_mask.5} parent=43 // pred_region
        %s750 = smul.u32 2, %s23
        %p751 = scmp.lt.s32.totalorder %s22, 1
        %s752 = scalar_select %p751, %s22, 1
        %p753 = scmp.lt.s32.totalorder %s750, 1
        %s754 = scalar_select %p753, %s750, 1
        %s755 = smul.addr %s752, 2
        %s756 = sadd.s32 %s754, %s755
        %s757 = smul.addr %s756, 8
        %s758 = scalar_lea.vmem %s4, %s757
      $region52: #{get_mask.5} parent=43 // pred_fallthru
        _
    $region44: #{get_mask.5} parent=5 // pred_fallthru
      _
  $region6: #{get_mask.5} parent=0 // loop_footer
    %s15 = sadd.s32 1, %s11
  $region7: #{get_mask.5} parent=0 // loop_footer_branch
    %10 = sbr.rel target = $region3
  $region8: #{get_mask.5} parent=0 // loop_exit
    _

</llo_original>
